<compile_context>
chip_gen: v6e
topology: v6e:2x2x1
jax: 0.10.0
libtpu: 0.0.40
codegen_flags: <defaults>
</compile_context>

<pallas_src>
import functools

import jax
import jax.numpy as jnp
from jax.experimental import pallas as pl
from jax.experimental.pallas import tpu as pltpu


def _round_up(x, m):
    return ((x + m - 1) // m) * m


def _mish(x):
    """Mish(x) = x * tanh(softplus(x)) with a single transcendental.

    tanh(log(1 + e^x)) == (t^2 + 2t) / (t^2 + 2t + 2) with t = e^x.  The exp
    argument is clamped; for x > 20, mish(x) == x to f32 precision anyway.
    Kept in f32: v5e has no bf16 VPU/EUP, and the EUP op count is already 1+1.
    """
    t = jnp.exp(jnp.minimum(x, 20.0))
    num = t * (t + 2.0)
    den = num + 2.0
    r = pl.reciprocal(den, approx=True)
    r = r * (2.0 - den * r)  # one Newton-Raphson step (VPU): full f32 accuracy
    return x * num * r


def _critic_kernel(state_ref, action_ref,
                   w1_ref, b1_ref,
                   w2_ref, b2_ref,
                   w3_ref, b3_ref,
                   w4_ref, b4_ref,
                   o_ref):
    # One resident (tb, state+action) activation tile; bf16 feeds the MXU natively.
    x = jnp.concatenate([state_ref[...], action_ref[...]], axis=-1)
    x = x.astype(jnp.bfloat16)
    rows = []
    for n in range(2):  # unrolled twin Q heads, sharing the resident x tile
        h = jnp.dot(x, w1_ref[n], preferred_element_type=jnp.float32) + b1_ref[n]
        h = _mish(h)
        h = jnp.dot(h.astype(jnp.bfloat16), w2_ref[n],
                    preferred_element_type=jnp.float32) + b2_ref[n]
        h = _mish(h)
        h = jnp.dot(h.astype(jnp.bfloat16), w3_ref[n],
                    preferred_element_type=jnp.float32) + b3_ref[n]
        h = _mish(h)
        # N=1 output head: VPU multiply + lane reduce instead of a ~99%-padded
        # MXU tile push.
        rows.append(jnp.sum(h * w4_ref[n], axis=-1))
    # Lane-dense (2, tb) store: q1 in row 0, q2 in row 1.
    o_ref[...] = (jnp.stack(rows, axis=0) + b4_ref[...]).astype(o_ref.dtype)


def critic_forward(state, action, params, *, block_batch=1024):
    """Fused forward for both Q-heads. Returns a (2, B) array: rows = [q1, q2]."""
    B, state_dim = state.shape
    _, action_dim = action.shape
    w1, b1, w2, b2, w3, b3, w4, b4 = params

    if B <= 128:
        tb = B  # single full-batch tile (block == full array dim is always legal)
    else:
        tb = min(int(block_batch), B)
        # Keep >= 2 batch tiles so the "parallel" axis can shard on v7x's 2 TCs.
        tb = min(tb, _round_up(pl.cdiv(B, 2), 128))
        tb = max((tb // 128) * 128, 128)  # 128-aligned M tile for the MXU
    grid = (pl.cdiv(B, tb),)

    def tile_spec(cols):
        return pl.BlockSpec((tb, cols), lambda i: (i, 0))

    def const_spec(arr):
        # Constant block index -> weights/biases stay VMEM-resident across the
        # grid.  (Single-buffering via pipeline_mode=pl.Buffered(1) only starts
        # to matter for hidden >= 768 f32 on v7x; bf16 storage already halves it.)
        return pl.BlockSpec(arr.shape, lambda i, _nd=arr.ndim: (0,) * _nd)

    return pl.pallas_call(
        _critic_kernel,
        out_shape=jax.ShapeDtypeStruct((2, B), jnp.float32),
        grid_spec=pltpu.PrefetchScalarGridSpec(
            num_scalar_prefetch=0,
            grid=grid,
            in_specs=[
                tile_spec(state_dim),
                tile_spec(action_dim),
                const_spec(w1), const_spec(b1),
                const_spec(w2), const_spec(b2),
                const_spec(w3), const_spec(b3),
                const_spec(w4), const_spec(b4),
            ],
            out_specs=pl.BlockSpec((2, tb), lambda i: (0, i)),
        ),
        compiler_params=pltpu.CompilerParams(
            dimension_semantics=("parallel",),   # shards batch tiles on v7x's 2 TCs
            vmem_limit_bytes=32 * 1024 * 1024,   # safe scoped budget on v5e/v6e/v7x
        ),
    )(state, action, w1, b1, w2, b2, w3, b3, w4, b4)


def _init_one_q(key, state_dim, action_dim, hidden_dim):
    """PyTorch Linear default init (uniform +/- 1/sqrt(fan_in)); W stored (in, out)."""
    in_dim = state_dim + action_dim
    dims = [(in_dim, hidden_dim), (hidden_dim, hidden_dim),
            (hidden_dim, hidden_dim), (hidden_dim, 1)]
    layers = []
    for fan_in, fan_out in dims:
        key, kw, kb = jax.random.split(key, 3)
        bound = float(fan_in) ** -0.5
        w = jax.random.uniform(kw, (fan_in, fan_out), jnp.float32, -bound, bound)
        b = jax.random.uniform(kb, (1, fan_out), jnp.float32, -bound, bound)
        layers.append((w, b))
    (w1, b1), (w2, b2), (w3, b3), (w4, b4) = layers
    # MXU layers stored bf16 (native MXU dtype on every generation); the VPU
    # final head (w4 as a (1, hidden) row) and all biases stay f32.
    return (w1.astype(jnp.bfloat16), b1,
            w2.astype(jnp.bfloat16), b2,
            w3.astype(jnp.bfloat16), b3,
            w4.reshape(1, hidden_dim), b4.reshape(1))


class CriticPallas:
    def __init__(self, state_dim, action_dim, hidden_dim=256, key=None, block_batch=1024):
        if key is None:
            key = jax.random.PRNGKey(0)
        k1, k2 = jax.random.split(key)
        p1 = _init_one_q(k1, state_dim, action_dim, hidden_dim)
        p2 = _init_one_q(k2, state_dim, action_dim, hidden_dim)
        # Stack q1/q2 parameters on a leading axis of 2 -> single fused kernel.
        self.params = tuple(jnp.stack([a, b], axis=0) for a, b in zip(p1, p2))
        self.block_batch = int(block_batch)

    @functools.partial(jax.jit, static_argnums=0)
    def forward(self, state, action):
        q = critic_forward(state, action, self.params, block_batch=self.block_batch)
        return q[0][:, None], q[1][:, None]

    def q1(self, state, action):
        # Both heads come out of the same fused kernel; return the q1 row.
        return self.forward(state, action)[0]

    def q_min(self, state, action):
        q1, q2 = self.forward(state, action)
        return jnp.minimum(q1, q2)


def _reference_forward(state, action, params):
    """Pure-JAX reference of the same math (PyTorch semantics, f32 activations)."""
    def mish(v):
        return v * jnp.tanh(jnp.logaddexp(v, 0.0))
    x = jnp.concatenate([state, action], axis=-1)
    w1, b1, w2, b2, w3, b3, w4, b4 = params
    outs = []
    for n in range(2):
        h = mish(x @ w1[n].astype(jnp.float32) + b1[n])
        h = mish(h @ w2[n].astype(jnp.float32) + b2[n])
        h = mish(h @ w3[n].astype(jnp.float32) + b3[n])
        outs.append(jnp.sum(h * w4[n], axis=-1, keepdims=True) + b4[n])
    return outs[0], outs[1]


if __name__ == "__main__":
    # Small synthetic shapes consistent with the module.
    batch = 256
    state_dim = 16
    action_dim = 8
    hidden_dim = 32

    key = jax.random.PRNGKey(0)
    k_state, k_action, k_params = jax.random.split(key, 3)

    state = jax.random.normal(k_state, (batch, state_dim), jnp.float32)
    action = jax.random.normal(k_action, (batch, action_dim), jnp.float32)

    # With batch=256 the tile logic picks tb=128 -> 2 grid steps (exercises the
    # pipeline and the "parallel" batch axis).
    critic = CriticPallas(state_dim, action_dim, hidden_dim, key=k_params,
                          block_batch=1024)

    q1, q2 = critic.forward(state, action)
    q1 = jax.block_until_ready(q1)
    q2 = jax.block_until_ready(q2)

    q1_ref, q2_ref = _reference_forward(state, action, critic.params)
    assert q1.shape == (batch, 1) and q2.shape == (batch, 1)
    # bf16 activation casts in the kernel vs f32 reference -> slightly looser tol.
    assert jnp.allclose(q1, q1_ref, atol=2e-2, rtol=2e-2)
    assert jnp.allclose(q2, q2_ref, atol=2e-2, rtol=2e-2)

    qmin = jax.block_until_ready(critic.q_min(state, action))
    assert jnp.allclose(qmin, jnp.minimum(q1_ref, q2_ref), atol=2e-2, rtol=2e-2)

    print("KERNEL_OK")
</pallas_src>

<mosaic_0001>
module attributes {stable_mosaic.version = 11 : i64} {
  func.func @_critic_kernel(%arg0: i32, %arg1: memref<128x16xf32, #tpu.memory_space<vmem>>, %arg2: memref<128x8xf32, #tpu.memory_space<vmem>>, %arg3: memref<2x24x32xbf16, #tpu.memory_space<vmem>>, %arg4: memref<2x1x32xf32, #tpu.memory_space<vmem>>, %arg5: memref<2x32x32xbf16, #tpu.memory_space<vmem>>, %arg6: memref<2x1x32xf32, #tpu.memory_space<vmem>>, %arg7: memref<2x32x32xbf16, #tpu.memory_space<vmem>>, %arg8: memref<2x1x32xf32, #tpu.memory_space<vmem>>, %arg9: memref<2x1x32xf32, #tpu.memory_space<vmem>>, %arg10: memref<2x1xf32, #tpu.memory_space<vmem>>, %arg11: memref<2x128xf32, #tpu.memory_space<vmem>>) attributes {dimension_semantics = [#tpu.dimension_semantics<parallel>], iteration_bounds = array<i64: 2>, scalar_prefetch = 0 : i64, scratch_operands = 0 : i64, tpu.core_type = #tpu.core_type<tc>, window_params = [{transform_indices = @transform_0, window_bounds = array<i64: 128, 16>}, {transform_indices = @transform_1, window_bounds = array<i64: 128, 8>}, {pipeline_mode = #tpu.pipeline_mode<synchronous>, transform_indices = @transform_2, window_bounds = array<i64: 2, 24, 32>}, {pipeline_mode = #tpu.pipeline_mode<synchronous>, transform_indices = @transform_3, window_bounds = array<i64: 2, 1, 32>}, {pipeline_mode = #tpu.pipeline_mode<synchronous>, transform_indices = @transform_4, window_bounds = array<i64: 2, 32, 32>}, {pipeline_mode = #tpu.pipeline_mode<synchronous>, transform_indices = @transform_5, window_bounds = array<i64: 2, 1, 32>}, {pipeline_mode = #tpu.pipeline_mode<synchronous>, transform_indices = @transform_6, window_bounds = array<i64: 2, 32, 32>}, {pipeline_mode = #tpu.pipeline_mode<synchronous>, transform_indices = @transform_7, window_bounds = array<i64: 2, 1, 32>}, {pipeline_mode = #tpu.pipeline_mode<synchronous>, transform_indices = @transform_8, window_bounds = array<i64: 2, 1, 32>}, {pipeline_mode = #tpu.pipeline_mode<synchronous>, transform_indices = @transform_9, window_bounds = array<i64: 2, 1>}, {transform_indices = @transform_10, window_bounds = array<i64: 2, 128>}]} {
    %c0 = arith.constant 0 : index
    %c0_0 = arith.constant 0 : index
    %0 = vector.load %arg1[%c0, %c0_0] : memref<128x16xf32, #tpu.memory_space<vmem>>, vector<128x16xf32>
    %c0_1 = arith.constant 0 : index
    %c0_2 = arith.constant 0 : index
    %1 = vector.load %arg2[%c0_1, %c0_2] : memref<128x8xf32, #tpu.memory_space<vmem>>, vector<128x8xf32>
    %2 = tpu.concatenate %0, %1 in 1 : vector<128x16xf32>, vector<128x8xf32> -> vector<128x24xf32>
    %3 = arith.truncf %2 : vector<128x24xf32> to vector<128x24xbf16>
    %c0_3 = arith.constant 0 : index
    %c0_4 = arith.constant 0 : index
    %c0_5 = arith.constant 0 : index
    %4 = vector.load %arg3[%c0_3, %c0_4, %c0_5] : memref<2x24x32xbf16, #tpu.memory_space<vmem>>, vector<1x24x32xbf16>
    %5 = vector.shape_cast %4 : vector<1x24x32xbf16> to vector<24x32xbf16>
    %cst = arith.constant dense<0.000000e+00> : vector<128x32xf32>
    %6 = tpu.matmul %3, %5, %cst {dimension_numbers = #tpu.dot_dimension_numbers<[1], [0], [0], [1], [0, 0, 1, 1], [], []>} : vector<128x24xbf16>, vector<24x32xbf16>, vector<128x32xf32> -> vector<128x32xf32>
    %c0_6 = arith.constant 0 : index
    %c0_7 = arith.constant 0 : index
    %c0_8 = arith.constant 0 : index
    %7 = vector.load %arg4[%c0_6, %c0_7, %c0_8] : memref<2x1x32xf32, #tpu.memory_space<vmem>>, vector<1x1x32xf32>
    %8 = vector.shape_cast %7 : vector<1x1x32xf32> to vector<1x32xf32>
    %9 = vector.broadcast %8 : vector<1x32xf32> to vector<128x32xf32>
    %10 = arith.addf %6, %9 : vector<128x32xf32>
    %cst_9 = arith.constant 2.000000e+01 : f32
    %11 = vector.broadcast %cst_9 : f32 to vector<128x32xf32>
    %12 = arith.minimumf %10, %11 : vector<128x32xf32>
    %13 = math.exp %12 : vector<128x32xf32>
    %cst_10 = arith.constant 2.000000e+00 : f32
    %14 = vector.broadcast %cst_10 : f32 to vector<128x32xf32>
    %15 = arith.addf %13, %14 : vector<128x32xf32>
    %16 = arith.mulf %13, %15 : vector<128x32xf32>
    %cst_11 = arith.constant 2.000000e+00 : f32
    %17 = vector.broadcast %cst_11 : f32 to vector<128x32xf32>
    %18 = arith.addf %16, %17 : vector<128x32xf32>
    %19 = tpu.reciprocal %18 {approx = true} : vector<128x32xf32> -> vector<128x32xf32>
    %20 = arith.mulf %18, %19 : vector<128x32xf32>
    %cst_12 = arith.constant 2.000000e+00 : f32
    %21 = vector.broadcast %cst_12 : f32 to vector<128x32xf32>
    %22 = arith.subf %21, %20 : vector<128x32xf32>
    %23 = arith.mulf %19, %22 : vector<128x32xf32>
    %24 = arith.mulf %10, %16 : vector<128x32xf32>
    %25 = arith.mulf %24, %23 : vector<128x32xf32>
    %26 = arith.truncf %25 : vector<128x32xf32> to vector<128x32xbf16>
    %c0_13 = arith.constant 0 : index
    %c0_14 = arith.constant 0 : index
    %c0_15 = arith.constant 0 : index
    %27 = vector.load %arg5[%c0_13, %c0_14, %c0_15] : memref<2x32x32xbf16, #tpu.memory_space<vmem>>, vector<1x32x32xbf16>
    %28 = vector.shape_cast %27 : vector<1x32x32xbf16> to vector<32x32xbf16>
    %cst_16 = arith.constant dense<0.000000e+00> : vector<128x32xf32>
    %29 = tpu.matmul %26, %28, %cst_16 {dimension_numbers = #tpu.dot_dimension_numbers<[1], [0], [0], [1], [0, 0, 1, 1], [], []>} : vector<128x32xbf16>, vector<32x32xbf16>, vector<128x32xf32> -> vector<128x32xf32>
    %c0_17 = arith.constant 0 : index
    %c0_18 = arith.constant 0 : index
    %c0_19 = arith.constant 0 : index
    %30 = vector.load %arg6[%c0_17, %c0_18, %c0_19] : memref<2x1x32xf32, #tpu.memory_space<vmem>>, vector<1x1x32xf32>
    %31 = vector.shape_cast %30 : vector<1x1x32xf32> to vector<1x32xf32>
    %32 = vector.broadcast %31 : vector<1x32xf32> to vector<128x32xf32>
    %33 = arith.addf %29, %32 : vector<128x32xf32>
    %cst_20 = arith.constant 2.000000e+01 : f32
    %34 = vector.broadcast %cst_20 : f32 to vector<128x32xf32>
    %35 = arith.minimumf %33, %34 : vector<128x32xf32>
    %36 = math.exp %35 : vector<128x32xf32>
    %cst_21 = arith.constant 2.000000e+00 : f32
    %37 = vector.broadcast %cst_21 : f32 to vector<128x32xf32>
    %38 = arith.addf %36, %37 : vector<128x32xf32>
    %39 = arith.mulf %36, %38 : vector<128x32xf32>
    %cst_22 = arith.constant 2.000000e+00 : f32
    %40 = vector.broadcast %cst_22 : f32 to vector<128x32xf32>
    %41 = arith.addf %39, %40 : vector<128x32xf32>
    %42 = tpu.reciprocal %41 {approx = true} : vector<128x32xf32> -> vector<128x32xf32>
    %43 = arith.mulf %41, %42 : vector<128x32xf32>
    %cst_23 = arith.constant 2.000000e+00 : f32
    %44 = vector.broadcast %cst_23 : f32 to vector<128x32xf32>
    %45 = arith.subf %44, %43 : vector<128x32xf32>
    %46 = arith.mulf %42, %45 : vector<128x32xf32>
    %47 = arith.mulf %33, %39 : vector<128x32xf32>
    %48 = arith.mulf %47, %46 : vector<128x32xf32>
    %49 = arith.truncf %48 : vector<128x32xf32> to vector<128x32xbf16>
    %c0_24 = arith.constant 0 : index
    %c0_25 = arith.constant 0 : index
    %c0_26 = arith.constant 0 : index
    %50 = vector.load %arg7[%c0_24, %c0_25, %c0_26] : memref<2x32x32xbf16, #tpu.memory_space<vmem>>, vector<1x32x32xbf16>
    %51 = vector.shape_cast %50 : vector<1x32x32xbf16> to vector<32x32xbf16>
    %cst_27 = arith.constant dense<0.000000e+00> : vector<128x32xf32>
    %52 = tpu.matmul %49, %51, %cst_27 {dimension_numbers = #tpu.dot_dimension_numbers<[1], [0], [0], [1], [0, 0, 1, 1], [], []>} : vector<128x32xbf16>, vector<32x32xbf16>, vector<128x32xf32> -> vector<128x32xf32>
    %c0_28 = arith.constant 0 : index
    %c0_29 = arith.constant 0 : index
    %c0_30 = arith.constant 0 : index
    %53 = vector.load %arg8[%c0_28, %c0_29, %c0_30] : memref<2x1x32xf32, #tpu.memory_space<vmem>>, vector<1x1x32xf32>
    %54 = vector.shape_cast %53 : vector<1x1x32xf32> to vector<1x32xf32>
    %55 = vector.broadcast %54 : vector<1x32xf32> to vector<128x32xf32>
    %56 = arith.addf %52, %55 : vector<128x32xf32>
    %cst_31 = arith.constant 2.000000e+01 : f32
    %57 = vector.broadcast %cst_31 : f32 to vector<128x32xf32>
    %58 = arith.minimumf %56, %57 : vector<128x32xf32>
    %59 = math.exp %58 : vector<128x32xf32>
    %cst_32 = arith.constant 2.000000e+00 : f32
    %60 = vector.broadcast %cst_32 : f32 to vector<128x32xf32>
    %61 = arith.addf %59, %60 : vector<128x32xf32>
    %62 = arith.mulf %59, %61 : vector<128x32xf32>
    %cst_33 = arith.constant 2.000000e+00 : f32
    %63 = vector.broadcast %cst_33 : f32 to vector<128x32xf32>
    %64 = arith.addf %62, %63 : vector<128x32xf32>
    %65 = tpu.reciprocal %64 {approx = true} : vector<128x32xf32> -> vector<128x32xf32>
    %66 = arith.mulf %64, %65 : vector<128x32xf32>
    %cst_34 = arith.constant 2.000000e+00 : f32
    %67 = vector.broadcast %cst_34 : f32 to vector<128x32xf32>
    %68 = arith.subf %67, %66 : vector<128x32xf32>
    %69 = arith.mulf %65, %68 : vector<128x32xf32>
    %70 = arith.mulf %56, %62 : vector<128x32xf32>
    %71 = arith.mulf %70, %69 : vector<128x32xf32>
    %c0_35 = arith.constant 0 : index
    %c0_36 = arith.constant 0 : index
    %c0_37 = arith.constant 0 : index
    %72 = vector.load %arg9[%c0_35, %c0_36, %c0_37] : memref<2x1x32xf32, #tpu.memory_space<vmem>>, vector<1x1x32xf32>
    %73 = vector.shape_cast %72 : vector<1x1x32xf32> to vector<1x32xf32>
    %74 = vector.broadcast %73 : vector<1x32xf32> to vector<128x32xf32>
    %75 = arith.mulf %71, %74 : vector<128x32xf32>
    %cst_38 = arith.constant dense<0.000000e+00> : vector<128xf32>
    %76 = vector.multi_reduction <add>, %75, %cst_38 [1] : vector<128x32xf32> to vector<128xf32>
    %c1 = arith.constant 1 : index
    %c0_39 = arith.constant 0 : index
    %c0_40 = arith.constant 0 : index
    %77 = vector.load %arg3[%c1, %c0_39, %c0_40] : memref<2x24x32xbf16, #tpu.memory_space<vmem>>, vector<1x24x32xbf16>
    %78 = vector.shape_cast %77 : vector<1x24x32xbf16> to vector<24x32xbf16>
    %cst_41 = arith.constant dense<0.000000e+00> : vector<128x32xf32>
    %79 = tpu.matmul %3, %78, %cst_41 {dimension_numbers = #tpu.dot_dimension_numbers<[1], [0], [0], [1], [0, 0, 1, 1], [], []>} : vector<128x24xbf16>, vector<24x32xbf16>, vector<128x32xf32> -> vector<128x32xf32>
    %c1_42 = arith.constant 1 : index
    %c0_43 = arith.constant 0 : index
    %c0_44 = arith.constant 0 : index
    %80 = vector.load %arg4[%c1_42, %c0_43, %c0_44] : memref<2x1x32xf32, #tpu.memory_space<vmem>>, vector<1x1x32xf32>
    %81 = vector.shape_cast %80 : vector<1x1x32xf32> to vector<1x32xf32>
    %82 = vector.broadcast %81 : vector<1x32xf32> to vector<128x32xf32>
    %83 = arith.addf %79, %82 : vector<128x32xf32>
    %cst_45 = arith.constant 2.000000e+01 : f32
    %84 = vector.broadcast %cst_45 : f32 to vector<128x32xf32>
    %85 = arith.minimumf %83, %84 : vector<128x32xf32>
    %86 = math.exp %85 : vector<128x32xf32>
    %cst_46 = arith.constant 2.000000e+00 : f32
    %87 = vector.broadcast %cst_46 : f32 to vector<128x32xf32>
    %88 = arith.addf %86, %87 : vector<128x32xf32>
    %89 = arith.mulf %86, %88 : vector<128x32xf32>
    %cst_47 = arith.constant 2.000000e+00 : f32
    %90 = vector.broadcast %cst_47 : f32 to vector<128x32xf32>
    %91 = arith.addf %89, %90 : vector<128x32xf32>
    %92 = tpu.reciprocal %91 {approx = true} : vector<128x32xf32> -> vector<128x32xf32>
    %93 = arith.mulf %91, %92 : vector<128x32xf32>
    %cst_48 = arith.constant 2.000000e+00 : f32
    %94 = vector.broadcast %cst_48 : f32 to vector<128x32xf32>
    %95 = arith.subf %94, %93 : vector<128x32xf32>
    %96 = arith.mulf %92, %95 : vector<128x32xf32>
    %97 = arith.mulf %83, %89 : vector<128x32xf32>
    %98 = arith.mulf %97, %96 : vector<128x32xf32>
    %99 = arith.truncf %98 : vector<128x32xf32> to vector<128x32xbf16>
    %c1_49 = arith.constant 1 : index
    %c0_50 = arith.constant 0 : index
    %c0_51 = arith.constant 0 : index
    %100 = vector.load %arg5[%c1_49, %c0_50, %c0_51] : memref<2x32x32xbf16, #tpu.memory_space<vmem>>, vector<1x32x32xbf16>
    %101 = vector.shape_cast %100 : vector<1x32x32xbf16> to vector<32x32xbf16>
    %cst_52 = arith.constant dense<0.000000e+00> : vector<128x32xf32>
    %102 = tpu.matmul %99, %101, %cst_52 {dimension_numbers = #tpu.dot_dimension_numbers<[1], [0], [0], [1], [0, 0, 1, 1], [], []>} : vector<128x32xbf16>, vector<32x32xbf16>, vector<128x32xf32> -> vector<128x32xf32>
    %c1_53 = arith.constant 1 : index
    %c0_54 = arith.constant 0 : index
    %c0_55 = arith.constant 0 : index
    %103 = vector.load %arg6[%c1_53, %c0_54, %c0_55] : memref<2x1x32xf32, #tpu.memory_space<vmem>>, vector<1x1x32xf32>
    %104 = vector.shape_cast %103 : vector<1x1x32xf32> to vector<1x32xf32>
    %105 = vector.broadcast %104 : vector<1x32xf32> to vector<128x32xf32>
    %106 = arith.addf %102, %105 : vector<128x32xf32>
    %cst_56 = arith.constant 2.000000e+01 : f32
    %107 = vector.broadcast %cst_56 : f32 to vector<128x32xf32>
    %108 = arith.minimumf %106, %107 : vector<128x32xf32>
    %109 = math.exp %108 : vector<128x32xf32>
    %cst_57 = arith.constant 2.000000e+00 : f32
    %110 = vector.broadcast %cst_57 : f32 to vector<128x32xf32>
    %111 = arith.addf %109, %110 : vector<128x32xf32>
    %112 = arith.mulf %109, %111 : vector<128x32xf32>
    %cst_58 = arith.constant 2.000000e+00 : f32
    %113 = vector.broadcast %cst_58 : f32 to vector<128x32xf32>
    %114 = arith.addf %112, %113 : vector<128x32xf32>
    %115 = tpu.reciprocal %114 {approx = true} : vector<128x32xf32> -> vector<128x32xf32>
    %116 = arith.mulf %114, %115 : vector<128x32xf32>
    %cst_59 = arith.constant 2.000000e+00 : f32
    %117 = vector.broadcast %cst_59 : f32 to vector<128x32xf32>
    %118 = arith.subf %117, %116 : vector<128x32xf32>
    %119 = arith.mulf %115, %118 : vector<128x32xf32>
    %120 = arith.mulf %106, %112 : vector<128x32xf32>
    %121 = arith.mulf %120, %119 : vector<128x32xf32>
    %122 = arith.truncf %121 : vector<128x32xf32> to vector<128x32xbf16>
    %c1_60 = arith.constant 1 : index
    %c0_61 = arith.constant 0 : index
    %c0_62 = arith.constant 0 : index
    %123 = vector.load %arg7[%c1_60, %c0_61, %c0_62] : memref<2x32x32xbf16, #tpu.memory_space<vmem>>, vector<1x32x32xbf16>
    %124 = vector.shape_cast %123 : vector<1x32x32xbf16> to vector<32x32xbf16>
    %cst_63 = arith.constant dense<0.000000e+00> : vector<128x32xf32>
    %125 = tpu.matmul %122, %124, %cst_63 {dimension_numbers = #tpu.dot_dimension_numbers<[1], [0], [0], [1], [0, 0, 1, 1], [], []>} : vector<128x32xbf16>, vector<32x32xbf16>, vector<128x32xf32> -> vector<128x32xf32>
    %c1_64 = arith.constant 1 : index
    %c0_65 = arith.constant 0 : index
    %c0_66 = arith.constant 0 : index
    %126 = vector.load %arg8[%c1_64, %c0_65, %c0_66] : memref<2x1x32xf32, #tpu.memory_space<vmem>>, vector<1x1x32xf32>
    %127 = vector.shape_cast %126 : vector<1x1x32xf32> to vector<1x32xf32>
    %128 = vector.broadcast %127 : vector<1x32xf32> to vector<128x32xf32>
    %129 = arith.addf %125, %128 : vector<128x32xf32>
    %cst_67 = arith.constant 2.000000e+01 : f32
    %130 = vector.broadcast %cst_67 : f32 to vector<128x32xf32>
    %131 = arith.minimumf %129, %130 : vector<128x32xf32>
    %132 = math.exp %131 : vector<128x32xf32>
    %cst_68 = arith.constant 2.000000e+00 : f32
    %133 = vector.broadcast %cst_68 : f32 to vector<128x32xf32>
    %134 = arith.addf %132, %133 : vector<128x32xf32>
    %135 = arith.mulf %132, %134 : vector<128x32xf32>
    %cst_69 = arith.constant 2.000000e+00 : f32
    %136 = vector.broadcast %cst_69 : f32 to vector<128x32xf32>
    %137 = arith.addf %135, %136 : vector<128x32xf32>
    %138 = tpu.reciprocal %137 {approx = true} : vector<128x32xf32> -> vector<128x32xf32>
    %139 = arith.mulf %137, %138 : vector<128x32xf32>
    %cst_70 = arith.constant 2.000000e+00 : f32
    %140 = vector.broadcast %cst_70 : f32 to vector<128x32xf32>
    %141 = arith.subf %140, %139 : vector<128x32xf32>
    %142 = arith.mulf %138, %141 : vector<128x32xf32>
    %143 = arith.mulf %129, %135 : vector<128x32xf32>
    %144 = arith.mulf %143, %142 : vector<128x32xf32>
    %c1_71 = arith.constant 1 : index
    %c0_72 = arith.constant 0 : index
    %c0_73 = arith.constant 0 : index
    %145 = vector.load %arg9[%c1_71, %c0_72, %c0_73] : memref<2x1x32xf32, #tpu.memory_space<vmem>>, vector<1x1x32xf32>
    %146 = vector.shape_cast %145 : vector<1x1x32xf32> to vector<1x32xf32>
    %147 = vector.broadcast %146 : vector<1x32xf32> to vector<128x32xf32>
    %148 = arith.mulf %144, %147 : vector<128x32xf32>
    %cst_74 = arith.constant dense<0.000000e+00> : vector<128xf32>
    %149 = vector.multi_reduction <add>, %148, %cst_74 [1] : vector<128x32xf32> to vector<128xf32>
    %150 = vector.shape_cast %76 : vector<128xf32> to vector<1x128xf32>
    %151 = vector.shape_cast %149 : vector<128xf32> to vector<1x128xf32>
    %152 = tpu.concatenate %150, %151 in 0 : vector<1x128xf32>, vector<1x128xf32> -> vector<2x128xf32>
    %c0_75 = arith.constant 0 : index
    %c0_76 = arith.constant 0 : index
    %153 = vector.load %arg10[%c0_75, %c0_76] : memref<2x1xf32, #tpu.memory_space<vmem>>, vector<2x1xf32>
    %154 = vector.broadcast %153 : vector<2x1xf32> to vector<2x128xf32>
    %155 = arith.addf %152, %154 : vector<2x128xf32>
    %c0_77 = arith.constant 0 : index
    %c0_78 = arith.constant 0 : index
    %156 = vector.load %arg11[%c0_77, %c0_78] : memref<2x128xf32, #tpu.memory_space<vmem>>, vector<2x128xf32>
    tpu.vector_store %arg11[%c0_77, %c0_78], %155 {strides = array<i32>} : memref<2x128xf32, #tpu.memory_space<vmem>>, vector<2x128xf32>,
    return
  }
  func.func @transform_0(%arg0: i32) -> (i32, i32) {
    %c0_i32 = arith.constant 0 : i32
    %c0_i32_0 = arith.constant 0 : i32
    return %arg0, %c0_i32 : i32, i32
  }
  func.func @transform_1(%arg0: i32) -> (i32, i32) {
    %c0_i32 = arith.constant 0 : i32
    %c0_i32_0 = arith.constant 0 : i32
    return %arg0, %c0_i32 : i32, i32
  }
  func.func @transform_2(%arg0: i32) -> (i32, i32, i32) {
    %c0_i32 = arith.constant 0 : i32
    %c0_i32_0 = arith.constant 0 : i32
    %c0_i32_1 = arith.constant 0 : i32
    %c0_i32_2 = arith.constant 0 : i32
    return %c0_i32, %c0_i32_0, %c0_i32_1 : i32, i32, i32
  }
  func.func @transform_3(%arg0: i32) -> (i32, i32, i32) {
    %c0_i32 = arith.constant 0 : i32
    %c0_i32_0 = arith.constant 0 : i32
    %c0_i32_1 = arith.constant 0 : i32
    %c0_i32_2 = arith.constant 0 : i32
    return %c0_i32, %c0_i32_0, %c0_i32_1 : i32, i32, i32
  }
  func.func @transform_4(%arg0: i32) -> (i32, i32, i32) {
    %c0_i32 = arith.constant 0 : i32
    %c0_i32_0 = arith.constant 0 : i32
    %c0_i32_1 = arith.constant 0 : i32
    %c0_i32_2 = arith.constant 0 : i32
    return %c0_i32, %c0_i32_0, %c0_i32_1 : i32, i32, i32
  }
  func.func @transform_5(%arg0: i32) -> (i32, i32, i32) {
    %c0_i32 = arith.constant 0 : i32
    %c0_i32_0 = arith.constant 0 : i32
    %c0_i32_1 = arith.constant 0 : i32
    %c0_i32_2 = arith.constant 0 : i32
    return %c0_i32, %c0_i32_0, %c0_i32_1 : i32, i32, i32
  }
  func.func @transform_6(%arg0: i32) -> (i32, i32, i32) {
    %c0_i32 = arith.constant 0 : i32
    %c0_i32_0 = arith.constant 0 : i32
    %c0_i32_1 = arith.constant 0 : i32
    %c0_i32_2 = arith.constant 0 : i32
    return %c0_i32, %c0_i32_0, %c0_i32_1 : i32, i32, i32
  }
  func.func @transform_7(%arg0: i32) -> (i32, i32, i32) {
    %c0_i32 = arith.constant 0 : i32
    %c0_i32_0 = arith.constant 0 : i32
    %c0_i32_1 = arith.constant 0 : i32
    %c0_i32_2 = arith.constant 0 : i32
    return %c0_i32, %c0_i32_0, %c0_i32_1 : i32, i32, i32
  }
  func.func @transform_8(%arg0: i32) -> (i32, i32, i32) {
    %c0_i32 = arith.constant 0 : i32
    %c0_i32_0 = arith.constant 0 : i32
    %c0_i32_1 = arith.constant 0 : i32
    %c0_i32_2 = arith.constant 0 : i32
    return %c0_i32, %c0_i32_0, %c0_i32_1 : i32, i32, i32
  }
  func.func @transform_9(%arg0: i32) -> (i32, i32) {
    %c0_i32 = arith.constant 0 : i32
    %c0_i32_0 = arith.constant 0 : i32
    %c0_i32_1 = arith.constant 0 : i32
    return %c0_i32, %c0_i32_0 : i32, i32
  }
  func.func @transform_10(%arg0: i32) -> (i32, i32) {
    %c0_i32 = arith.constant 0 : i32
    %c0_i32_0 = arith.constant 0 : i32
    return %c0_i32, %arg0 : i32, i32
  }
}

</mosaic_0001>

<llo_original>
// kernel: forward.1
$region0: #{forward.1}
  #allocation0 [shape = 'u32[]', space=smem, size = 0x4, offset = 0x4, fixed_abs, tag = 'smem constant byte address 0x4 - core index']
  #allocation1 [shape = 'u32[144,128]{1,0:T(1,128)}', space=vmem, size = 0x12000, scoped, tag = 'internal scratch']
  %s0 = inlined_call_operand.vmem [shape: f32[256,16], index: 0, kind: input, shape index: {}]
  %s1 = inlined_call_operand.vmem [shape: f32[256,8], index: 1, kind: input, shape index: {}]
  %s2 = inlined_call_operand.vmem [shape: bf16[2,24,32], index: 2, kind: input, shape index: {}]
  %s3 = inlined_call_operand.vmem [shape: f32[2,1,32], index: 3, kind: input, shape index: {}]
  %s4 = inlined_call_operand.vmem [shape: bf16[2,32,32], index: 4, kind: input, shape index: {}]
  %s5 = inlined_call_operand.vmem [shape: f32[2,1,32], index: 5, kind: input, shape index: {}]
  %s6 = inlined_call_operand.vmem [shape: bf16[2,32,32], index: 6, kind: input, shape index: {}]
  %s7 = inlined_call_operand.vmem [shape: f32[2,1,32], index: 7, kind: input, shape index: {}]
  %s8 = inlined_call_operand.vmem [shape: f32[2,1,32], index: 8, kind: input, shape index: {}]
  %s9 = inlined_call_operand.vmem [shape: f32[2,1], index: 9, kind: input, shape index: {}]
  %s10 = inlined_call_operand.vmem [shape: f32[2,256], index: 10, kind: output, shape index: {}]
  %s11 = sld [smem:[#allocation0]]
  $region73: #{forward.1} parent=0
    _
  %s13 = ssub.s32 1, %s11
  %s14 = scalar_select 0, %s13, %s11
  loop: start=0, step=1, limit=4
  $region2: #{forward.1} parent=0 // loop_pre_header
    _
  $region3: #{forward.1} parent=0 // loop_header
    %s16 = sphi 0, %s20
    %p17 = scmp.ge.s32.totalorder %s16, 4
    %s26 = sphi 0, %s28
    %s29 = sphi 0, %s26
    %s30 = sphi 0, %s29
    %s46 = sphi 0, %s30
    %s52 = sphi 0, %s54
    %s55 = sphi 0, %s52
    %s56 = sphi 0, %s55
    %s72 = sphi 0, %s56
    %s76 = sphi 0, %s76
    %s78 = sphi 0, %s76
    %s79 = sphi 0, %s78
    %s93 = sphi 0, %s79
    %s97 = sphi 0, %s97
    %s99 = sphi 0, %s97
    %s100 = sphi 0, %s99
    %s114 = sphi 0, %s100
    %s118 = sphi 0, %s118
    %s120 = sphi 0, %s118
    %s121 = sphi 0, %s120
    %s135 = sphi 0, %s121
    %s139 = sphi 0, %s139
    %s141 = sphi 0, %s139
    %s142 = sphi 0, %s141
    %s156 = sphi 0, %s142
    %s160 = sphi 0, %s160
    %s162 = sphi 0, %s160
    %s163 = sphi 0, %s162
    %s177 = sphi 0, %s163
    %s181 = sphi 0, %s181
    %s183 = sphi 0, %s181
    %s184 = sphi 0, %s183
    %s198 = sphi 0, %s184
    %s202 = sphi 0, %s202
    %s204 = sphi 0, %s202
    %s205 = sphi 0, %s204
    %s219 = sphi 0, %s205
    %s223 = sphi 0, %s223
    %s225 = sphi 0, %s223
    %s226 = sphi 0, %s225
    %s240 = sphi 0, %s226
    %s246 = sphi 0, %s248
    %s249 = sphi 0, %s246
    %s250 = sphi 0, %s249
    %s266 = sphi 0, %s250
  $region4: #{forward.1} parent=0 // loop_header_branch
    %19 = sbr.rel (%p17) target = $region8
  $region5: #{forward.1} parent=0 // loop_body
    %s21 = ssub.s32 %s16, 1
    %s22 = ssub.s32 %s16, 2
    %s23 = sadd.s32 %s16, 1
    %s24 = ssub.s32 %s16, %s23
    %p25 = scmp.eq.s32.totalorder %s24, 0
    %s27 = sadd.s32 %s26, 1
    %s28 = scalar_select %p25, %s26, %s27
    %p31 = pneg %p25
    %p32 = scmp.eq.s32.totalorder %s16, 1
    %p33 = por %p31, %p32
    %p34 = scmp.ne.s32.totalorder %s26, %s29
    %p35 = scmp.eq.s32.totalorder %s16, 0
    %p36 = por %p34, %p35
    %p37 = scmp.ne.s32.totalorder %s26, %s29
    %p38 = scmp.eq.s32.totalorder %s21, 1
    %p39 = por %p37, %p38
    %p40 = scmp.ne.s32.totalorder %s29, %s30
    %p41 = scmp.eq.s32.totalorder %s21, 0
    %p42 = por %p40, %p41
    %p43 = scmp.ne.s32.totalorder %s29, %s30
    %p44 = scmp.eq.s32.totalorder %s22, 1
    %p45 = por %p43, %p44
    %p47 = scmp.ne.s32.totalorder %s30, %s46
    %p48 = scmp.eq.s32.totalorder %s22, 0
    %p49 = por %p47, %p48
    %s50 = ssub.s32 %s16, %s23
    %p51 = scmp.eq.s32.totalorder %s50, 0
    %s53 = sadd.s32 %s52, 1
    %s54 = scalar_select %p51, %s52, %s53
    %p57 = pneg %p51
    %p58 = scmp.eq.s32.totalorder %s16, 1
    %p59 = por %p57, %p58
    %p60 = scmp.ne.s32.totalorder %s52, %s55
    %p61 = scmp.eq.s32.totalorder %s16, 0
    %p62 = por %p60, %p61
    %p63 = scmp.ne.s32.totalorder %s52, %s55
    %p64 = scmp.eq.s32.totalorder %s21, 1
    %p65 = por %p63, %p64
    %p66 = scmp.ne.s32.totalorder %s55, %s56
    %p67 = scmp.eq.s32.totalorder %s21, 0
    %p68 = por %p66, %p67
    %p69 = scmp.ne.s32.totalorder %s55, %s56
    %p70 = scmp.eq.s32.totalorder %s22, 1
    %p71 = por %p69, %p70
    %p73 = scmp.ne.s32.totalorder %s56, %s72
    %p74 = scmp.eq.s32.totalorder %s22, 0
    %p75 = por %p73, %p74
    %s77 = sadd.s32 %s76, 1
    %p80 = scmp.eq.s32.totalorder %s16, 1
    %p81 = scmp.ne.s32.totalorder %s76, %s78
    %p82 = scmp.eq.s32.totalorder %s16, 0
    %p83 = por %p81, %p82
    %p84 = scmp.ne.s32.totalorder %s76, %s78
    %p85 = scmp.eq.s32.totalorder %s21, 1
    %p86 = por %p84, %p85
    %p87 = scmp.ne.s32.totalorder %s78, %s79
    %p88 = scmp.eq.s32.totalorder %s21, 0
    %p89 = por %p87, %p88
    %p90 = scmp.ne.s32.totalorder %s78, %s79
    %p91 = scmp.eq.s32.totalorder %s22, 1
    %p92 = por %p90, %p91
    %p94 = scmp.ne.s32.totalorder %s79, %s93
    %p95 = scmp.eq.s32.totalorder %s22, 0
    %p96 = por %p94, %p95
    %s98 = sadd.s32 %s97, 1
    %p101 = scmp.eq.s32.totalorder %s16, 1
    %p102 = scmp.ne.s32.totalorder %s97, %s99
    %p103 = scmp.eq.s32.totalorder %s16, 0
    %p104 = por %p102, %p103
    %p105 = scmp.ne.s32.totalorder %s97, %s99
    %p106 = scmp.eq.s32.totalorder %s21, 1
    %p107 = por %p105, %p106
    %p108 = scmp.ne.s32.totalorder %s99, %s100
    %p109 = scmp.eq.s32.totalorder %s21, 0
    %p110 = por %p108, %p109
    %p111 = scmp.ne.s32.totalorder %s99, %s100
    %p112 = scmp.eq.s32.totalorder %s22, 1
    %p113 = por %p111, %p112
    %p115 = scmp.ne.s32.totalorder %s100, %s114
    %p116 = scmp.eq.s32.totalorder %s22, 0
    %p117 = por %p115, %p116
    %s119 = sadd.s32 %s118, 1
    %p122 = scmp.eq.s32.totalorder %s16, 1
    %p123 = scmp.ne.s32.totalorder %s118, %s120
    %p124 = scmp.eq.s32.totalorder %s16, 0
    %p125 = por %p123, %p124
    %p126 = scmp.ne.s32.totalorder %s118, %s120
    %p127 = scmp.eq.s32.totalorder %s21, 1
    %p128 = por %p126, %p127
    %p129 = scmp.ne.s32.totalorder %s120, %s121
    %p130 = scmp.eq.s32.totalorder %s21, 0
    %p131 = por %p129, %p130
    %p132 = scmp.ne.s32.totalorder %s120, %s121
    %p133 = scmp.eq.s32.totalorder %s22, 1
    %p134 = por %p132, %p133
    %p136 = scmp.ne.s32.totalorder %s121, %s135
    %p137 = scmp.eq.s32.totalorder %s22, 0
    %p138 = por %p136, %p137
    %s140 = sadd.s32 %s139, 1
    %p143 = scmp.eq.s32.totalorder %s16, 1
    %p144 = scmp.ne.s32.totalorder %s139, %s141
    %p145 = scmp.eq.s32.totalorder %s16, 0
    %p146 = por %p144, %p145
    %p147 = scmp.ne.s32.totalorder %s139, %s141
    %p148 = scmp.eq.s32.totalorder %s21, 1
    %p149 = por %p147, %p148
    %p150 = scmp.ne.s32.totalorder %s141, %s142
    %p151 = scmp.eq.s32.totalorder %s21, 0
    %p152 = por %p150, %p151
    %p153 = scmp.ne.s32.totalorder %s141, %s142
    %p154 = scmp.eq.s32.totalorder %s22, 1
    %p155 = por %p153, %p154
    %p157 = scmp.ne.s32.totalorder %s142, %s156
    %p158 = scmp.eq.s32.totalorder %s22, 0
    %p159 = por %p157, %p158
    %s161 = sadd.s32 %s160, 1
    %p164 = scmp.eq.s32.totalorder %s16, 1
    %p165 = scmp.ne.s32.totalorder %s160, %s162
    %p166 = scmp.eq.s32.totalorder %s16, 0
    %p167 = por %p165, %p166
    %p168 = scmp.ne.s32.totalorder %s160, %s162
    %p169 = scmp.eq.s32.totalorder %s21, 1
    %p170 = por %p168, %p169
    %p171 = scmp.ne.s32.totalorder %s162, %s163
    %p172 = scmp.eq.s32.totalorder %s21, 0
    %p173 = por %p171, %p172
    %p174 = scmp.ne.s32.totalorder %s162, %s163
    %p175 = scmp.eq.s32.totalorder %s22, 1
    %p176 = por %p174, %p175
    %p178 = scmp.ne.s32.totalorder %s163, %s177
    %p179 = scmp.eq.s32.totalorder %s22, 0
    %p180 = por %p178, %p179
    %s182 = sadd.s32 %s181, 1
    %p185 = scmp.eq.s32.totalorder %s16, 1
    %p186 = scmp.ne.s32.totalorder %s181, %s183
    %p187 = scmp.eq.s32.totalorder %s16, 0
    %p188 = por %p186, %p187
    %p189 = scmp.ne.s32.totalorder %s181, %s183
    %p190 = scmp.eq.s32.totalorder %s21, 1
    %p191 = por %p189, %p190
    %p192 = scmp.ne.s32.totalorder %s183, %s184
    %p193 = scmp.eq.s32.totalorder %s21, 0
    %p194 = por %p192, %p193
    %p195 = scmp.ne.s32.totalorder %s183, %s184
    %p196 = scmp.eq.s32.totalorder %s22, 1
    %p197 = por %p195, %p196
    %p199 = scmp.ne.s32.totalorder %s184, %s198
    %p200 = scmp.eq.s32.totalorder %s22, 0
    %p201 = por %p199, %p200
    %s203 = sadd.s32 %s202, 1
    %p206 = scmp.eq.s32.totalorder %s16, 1
    %p207 = scmp.ne.s32.totalorder %s202, %s204
    %p208 = scmp.eq.s32.totalorder %s16, 0
    %p209 = por %p207, %p208
    %p210 = scmp.ne.s32.totalorder %s202, %s204
    %p211 = scmp.eq.s32.totalorder %s21, 1
    %p212 = por %p210, %p211
    %p213 = scmp.ne.s32.totalorder %s204, %s205
    %p214 = scmp.eq.s32.totalorder %s21, 0
    %p215 = por %p213, %p214
    %p216 = scmp.ne.s32.totalorder %s204, %s205
    %p217 = scmp.eq.s32.totalorder %s22, 1
    %p218 = por %p216, %p217
    %p220 = scmp.ne.s32.totalorder %s205, %s219
    %p221 = scmp.eq.s32.totalorder %s22, 0
    %p222 = por %p220, %p221
    %s224 = sadd.s32 %s223, 1
    %p227 = scmp.eq.s32.totalorder %s16, 1
    %p228 = scmp.ne.s32.totalorder %s223, %s225
    %p229 = scmp.eq.s32.totalorder %s16, 0
    %p230 = por %p228, %p229
    %p231 = scmp.ne.s32.totalorder %s223, %s225
    %p232 = scmp.eq.s32.totalorder %s21, 1
    %p233 = por %p231, %p232
    %p234 = scmp.ne.s32.totalorder %s225, %s226
    %p235 = scmp.eq.s32.totalorder %s21, 0
    %p236 = por %p234, %p235
    %p237 = scmp.ne.s32.totalorder %s225, %s226
    %p238 = scmp.eq.s32.totalorder %s22, 1
    %p239 = por %p237, %p238
    %p241 = scmp.ne.s32.totalorder %s226, %s240
    %p242 = scmp.eq.s32.totalorder %s22, 0
    %p243 = por %p241, %p242
    %s244 = ssub.s32 %s16, %s23
    %p245 = scmp.eq.s32.totalorder %s244, 0
    %s247 = sadd.s32 %s246, 1
    %s248 = scalar_select %p245, %s246, %s247
    %p251 = pneg %p245
    %p252 = scmp.eq.s32.totalorder %s16, 1
    %p253 = por %p251, %p252
    %p254 = scmp.ne.s32.totalorder %s246, %s249
    %p255 = scmp.eq.s32.totalorder %s16, 0
    %p256 = por %p254, %p255
    %p257 = scmp.ne.s32.totalorder %s246, %s249
    %p258 = scmp.eq.s32.totalorder %s21, 1
    %p259 = por %p257, %p258
    %p260 = scmp.ne.s32.totalorder %s249, %s250
    %p261 = scmp.eq.s32.totalorder %s21, 0
    %p262 = por %p260, %p261
    %p263 = scmp.ne.s32.totalorder %s249, %s250
    %p264 = scmp.eq.s32.totalorder %s22, 1
    %p265 = por %p263, %p264
    %p267 = scmp.ne.s32.totalorder %s250, %s266
    %p268 = scmp.eq.s32.totalorder %s22, 0
    %p269 = por %p267, %p268
    %p270 = scmp.le.s32.totalorder 1, %s16
    %p271 = scmp.lt.s32.totalorder %s16, 3
    %p272 = pnand %p270, %p271
    %p273 = pneg %p272
    // Predicated region
    $region9: #{forward.1} parent=5 // pred_check
      _
    $region10: #{forward.1} parent=5 // pred_check_branch
      %275 = sbr.rel (%p272) target = $region12
    $region11: #{forward.1} parent=5 // pred_region
      %s276 = ssub.s32 %s16, 1
      // Predicated region
      $region13: #{forward.1} parent=11 // pred_check
        %p277 = pneg %p89
      $region14: #{forward.1} parent=11 // pred_check_branch
        %279 = sbr.rel (%p277) target = $region16
      $region15: #{forward.1} parent=11 // pred_region
        _
      $region16: #{forward.1} parent=11 // pred_fallthru
        _
      // Predicated region
      $region17: #{forward.1} parent=11 // pred_check
        %p280 = pneg %p110
      $region18: #{forward.1} parent=11 // pred_check_branch
        %282 = sbr.rel (%p280) target = $region20
      $region19: #{forward.1} parent=11 // pred_region
        _
      $region20: #{forward.1} parent=11 // pred_fallthru
        _
      // Predicated region
      $region21: #{forward.1} parent=11 // pred_check
        %p283 = pneg %p131
      $region22: #{forward.1} parent=11 // pred_check_branch
        %285 = sbr.rel (%p283) target = $region24
      $region23: #{forward.1} parent=11 // pred_region
        _
      $region24: #{forward.1} parent=11 // pred_fallthru
        _
      // Predicated region
      $region25: #{forward.1} parent=11 // pred_check
        %p286 = pneg %p152
      $region26: #{forward.1} parent=11 // pred_check_branch
        %288 = sbr.rel (%p286) target = $region28
      $region27: #{forward.1} parent=11 // pred_region
        _
      $region28: #{forward.1} parent=11 // pred_fallthru
        _
      // Predicated region
      $region29: #{forward.1} parent=11 // pred_check
        %p289 = pneg %p173
      $region30: #{forward.1} parent=11 // pred_check_branch
        %291 = sbr.rel (%p289) target = $region32
      $region31: #{forward.1} parent=11 // pred_region
        _
      $region32: #{forward.1} parent=11 // pred_fallthru
        _
      // Predicated region
      $region33: #{forward.1} parent=11 // pred_check
        %p292 = pneg %p194
      $region34: #{forward.1} parent=11 // pred_check_branch
        %294 = sbr.rel (%p292) target = $region36
      $region35: #{forward.1} parent=11 // pred_region
        _
      $region36: #{forward.1} parent=11 // pred_fallthru
        _
      // Predicated region
      $region37: #{forward.1} parent=11 // pred_check
        %p295 = pneg %p215
      $region38: #{forward.1} parent=11 // pred_check_branch
        %297 = sbr.rel (%p295) target = $region40
      $region39: #{forward.1} parent=11 // pred_region
        _
      $region40: #{forward.1} parent=11 // pred_fallthru
        _
      // Predicated region
      $region41: #{forward.1} parent=11 // pred_check
        %p298 = pneg %p236
      $region42: #{forward.1} parent=11 // pred_check_branch
        %300 = sbr.rel (%p298) target = $region44
      $region43: #{forward.1} parent=11 // pred_region
        _
      $region44: #{forward.1} parent=11 // pred_fallthru
        _
    $region12: #{forward.1} parent=5 // pred_fallthru
      _
    %p301 = scmp.lt.s32.totalorder %s16, 2
    // Predicated region
    $region45: #{forward.1} parent=5 // pred_check
      %p302 = pneg %p301
    $region46: #{forward.1} parent=5 // pred_check_branch
      %304 = sbr.rel (%p302) target = $region48
    $region47: #{forward.1} parent=5 // pred_region
      // Predicated region
      $region49: #{forward.1} parent=47 // pred_check
        %p305 = pneg %p36
      $region50: #{forward.1} parent=47 // pred_check_branch
        %307 = sbr.rel (%p305) target = $region52
      $region51: #{forward.1} parent=47 // pred_region
        %s308 = smul.u32 16, %s16
        %p309 = scmp.lt.s32.totalorder %s308, 31
        %s310 = scalar_select %p309, %s308, 31
        %s311 = smul.addr %s310, 8
        %s312 = scalar_lea.vmem %s0, %s311
        %s313 = smul.u32 16, %s16
      $region52: #{forward.1} parent=47 // pred_fallthru
        _
      // Predicated region
      $region53: #{forward.1} parent=47 // pred_check
        %p314 = pneg %p62
      $region54: #{forward.1} parent=47 // pred_check_branch
        %316 = sbr.rel (%p314) target = $region56
      $region55: #{forward.1} parent=47 // pred_region
        %s317 = smul.u32 16, %s16
        %p318 = scmp.lt.s32.totalorder %s317, 31
        %s319 = scalar_select %p318, %s317, 31
        %s320 = smul.addr %s319, 8
        %s321 = scalar_lea.vmem %s1, %s320
        %s322 = smul.u32 16, %s16
      $region56: #{forward.1} parent=47 // pred_fallthru
        _
    $region48: #{forward.1} parent=5 // pred_fallthru
      _
    %p323 = scmp.le.s32.totalorder 1, %s16
    %p324 = scmp.lt.s32.totalorder %s16, 3
    %p325 = pnand %p323, %p324
    %p326 = pneg %p325
    // Predicated region
    $region57: #{forward.1} parent=5 // pred_check
      _
    $region58: #{forward.1} parent=5 // pred_check_branch
      %328 = sbr.rel (%p325) target = $region60
    $region59: #{forward.1} parent=5 // pred_region
      %s329 = ssub.s32 %s16, 1
      %s330 = smul.u32 16, %s21
      %p331 = scmp.lt.s32.totalorder %s330, 31
      %s332 = scalar_select %p331, %s330, 31
      %s333 = smul.addr %s332, 8
      %s334 = scalar_lea.vmem %s0, %s333
      %p335 = pneg %p42
      %p336 = pneg %p39
      %s337 = smul.u32 16, %s21
      %p338 = scmp.lt.s32.totalorder %s337, 31
      %s339 = scalar_select %p338, %s337, 31
      %s340 = smul.addr %s339, 8
      %s341 = scalar_lea.vmem %s1, %s340
      %p342 = pneg %p68
      %p343 = pneg %p65
      %p344 = pneg %p89
      %p345 = pneg %p86
      %p346 = pneg %p110
      %p347 = pneg %p107
      %p348 = pneg %p131
      %p349 = pneg %p128
      %p350 = pneg %p152
      %p351 = pneg %p149
      %p352 = pneg %p173
      %p353 = pneg %p170
      %p354 = pneg %p194
      %p355 = pneg %p191
      %p356 = pneg %p215
      %p357 = pneg %p212
      %p358 = pneg %p236
      %p359 = pneg %p233
      %p360 = pneg %p262
      %p361 = pneg %p259
      %p362 = scmp.lt.s32.totalorder %s21, 1
      %s363 = scalar_select %p362, %s21, 1
      %s364 = smul.addr %s363, 2
      %s365 = scalar_lea.vmem %s10, %s364
      %s366 = smul.u32 16, %s21
      %p367 = scmp.lt.s32.totalorder %s366, 31
      %s368 = scalar_select %p367, %s366, 31
      %s369 = smul.addr %s368, 8
      %s370 = scalar_lea.vmem %s0, %s369
      %s371 = smul.u32 16, %s21
      %s372 = smul.u32 16, %s21
      %p373 = scmp.lt.s32.totalorder %s372, 31
      %s374 = scalar_select %p373, %s372, 31
      %s375 = smul.addr %s374, 8
      %s376 = scalar_lea.vmem %s1, %s375
      %s377 = smul.u32 16, %s21
      %p378 = scmp.lt.s32.totalorder %s21, 1
      %s379 = scalar_select %p378, %s21, 1
      %s380 = smul.addr %s379, 2
      %s381 = scalar_lea.vmem %s10, %s380
      %v383 = vld [vmem:[%s370] sm:$0xff]
      %v384 = vld [vmem:[%s370 + $0x8] sm:$0xff]
      %v385 = vld [vmem:[%s370 + $0x10] sm:$0xff]
      %v386 = vld [vmem:[%s370 + $0x18] sm:$0xff]
      %v387 = vld [vmem:[%s370 + $0x20] sm:$0xff]
      %v388 = vld [vmem:[%s370 + $0x28] sm:$0xff]
      %v389 = vld [vmem:[%s370 + $0x30] sm:$0xff]
      %v390 = vld [vmem:[%s370 + $0x38] sm:$0xff]
      %v391 = vld [vmem:[%s370 + $0x40] sm:$0xff]
      %v392 = vld [vmem:[%s370 + $0x48] sm:$0xff]
      %v393 = vld [vmem:[%s370 + $0x50] sm:$0xff]
      %v394 = vld [vmem:[%s370 + $0x58] sm:$0xff]
      %v395 = vld [vmem:[%s370 + $0x60] sm:$0xff]
      %v396 = vld [vmem:[%s370 + $0x68] sm:$0xff]
      %v397 = vld [vmem:[%s370 + $0x70] sm:$0xff]
      %v398 = vld [vmem:[%s370 + $0x78] sm:$0xff]
      %v399 = vld [vmem:[%s376] sm:$0xff]
      %v400 = vld [vmem:[%s376 + $0x8] sm:$0xff]
      %v401 = vld [vmem:[%s376 + $0x10] sm:$0xff]
      %v402 = vld [vmem:[%s376 + $0x18] sm:$0xff]
      %v403 = vld [vmem:[%s376 + $0x20] sm:$0xff]
      %v404 = vld [vmem:[%s376 + $0x28] sm:$0xff]
      %v405 = vld [vmem:[%s376 + $0x30] sm:$0xff]
      %v406 = vld [vmem:[%s376 + $0x38] sm:$0xff]
      %v407 = vld [vmem:[%s376 + $0x40] sm:$0xff]
      %v408 = vld [vmem:[%s376 + $0x48] sm:$0xff]
      %v409 = vld [vmem:[%s376 + $0x50] sm:$0xff]
      %v410 = vld [vmem:[%s376 + $0x58] sm:$0xff]
      %v411 = vld [vmem:[%s376 + $0x60] sm:$0xff]
      %v412 = vld [vmem:[%s376 + $0x68] sm:$0xff]
      %v413 = vld [vmem:[%s376 + $0x70] sm:$0xff]
      %v414 = vld [vmem:[%s376 + $0x78] sm:$0xff]
      %431 = vrot.lane.b32.xlu0 %v399, 16
      %v432 = vpop.permute.xlu0 %431
      %433 = vrot.lane.b32.xlu0 %v400, 16
      %v434 = vpop.permute.xlu0 %433
      %435 = vrot.lane.b32.xlu0 %v401, 16
      %v436 = vpop.permute.xlu0 %435
      %437 = vrot.lane.b32.xlu0 %v402, 16
      %v438 = vpop.permute.xlu0 %437
      %439 = vrot.lane.b32.xlu0 %v403, 16
      %v440 = vpop.permute.xlu0 %439
      %441 = vrot.lane.b32.xlu0 %v404, 16
      %v442 = vpop.permute.xlu0 %441
      %443 = vrot.lane.b32.xlu0 %v405, 16
      %v444 = vpop.permute.xlu0 %443
      %445 = vrot.lane.b32.xlu0 %v406, 16
      %v446 = vpop.permute.xlu0 %445
      %447 = vrot.lane.b32.xlu0 %v407, 16
      %v448 = vpop.permute.xlu0 %447
      %449 = vrot.lane.b32.xlu0 %v408, 16
      %v450 = vpop.permute.xlu0 %449
      %451 = vrot.lane.b32.xlu0 %v409, 16
      %v452 = vpop.permute.xlu0 %451
      %453 = vrot.lane.b32.xlu0 %v410, 16
      %v454 = vpop.permute.xlu0 %453
      %455 = vrot.lane.b32.xlu0 %v411, 16
      %v456 = vpop.permute.xlu0 %455
      %457 = vrot.lane.b32.xlu0 %v412, 16
      %v458 = vpop.permute.xlu0 %457
      %459 = vrot.lane.b32.xlu0 %v413, 16
      %v460 = vpop.permute.xlu0 %459
      %461 = vrot.lane.b32.xlu0 %v414, 16
      %v462 = vpop.permute.xlu0 %461
      %vm479 = vcmask 130048
      %v480 = vsel %vm479, %v383, %v432
      %v481 = vsel %vm479, %v384, %v434
      %v482 = vsel %vm479, %v385, %v436
      %v483 = vsel %vm479, %v386, %v438
      %v484 = vsel %vm479, %v387, %v440
      %v485 = vsel %vm479, %v388, %v442
      %v486 = vsel %vm479, %v389, %v444
      %v487 = vsel %vm479, %v390, %v446
      %v488 = vsel %vm479, %v391, %v448
      %v489 = vsel %vm479, %v392, %v450
      %v490 = vsel %vm479, %v393, %v452
      %v491 = vsel %vm479, %v394, %v454
      %v492 = vsel %vm479, %v395, %v456
      %v493 = vsel %vm479, %v396, %v458
      %v494 = vsel %vm479, %v397, %v460
      %v495 = vsel %vm479, %v398, %v462
      %v496 = vpack.c.bf16 %v481, %v480
      %v497 = vpack.c.bf16 %v483, %v482
      %v498 = vpack.c.bf16 %v485, %v484
      %v499 = vpack.c.bf16 %v487, %v486
      %v500 = vpack.c.bf16 %v489, %v488
      %v501 = vpack.c.bf16 %v491, %v490
      %v502 = vpack.c.bf16 %v493, %v492
      %v503 = vpack.c.bf16 %v495, %v494
      %v504 = vld [vmem:[%s2] sm:$0xf]
      %v505 = vld [vmem:[%s2 + $0x4] sm:$0xf]
      %v506 = vld [vmem:[%s2 + $0x8] sm:$0xf]
      %v507 = vld [vmem:[%s3] sm:$0x1]
      %v509 = vlaneseq
      %v510 = vshrl.u32 %v509, 7
      %v511 = vsub.s32 0, %v510
      %v512 = vrot.slane %v507, %v511
      %v517 = vunpack.c.l.b16 %v504
      %v518 = vunpack.c.l.b16 %v505
      %v519 = vunpack.c.l.b16 %v506
      %v520 = vpack.c.b16 %v518, %v517
      %v521 = vpack.c.b16 %v519, %v519
      %vm523 = vcmask 195584
      %v525 = vsel %vm523, %v496, 0
      %v528 = vsel %vm523, %v497, 0
      %v531 = vsel %vm523, %v498, 0
      %v534 = vsel %vm523, %v499, 0
      %v537 = vsel %vm523, %v500, 0
      %v540 = vsel %vm523, %v501, 0
      %v543 = vsel %vm523, %v502, 0
      %v546 = vsel %vm523, %v503, 0
      %vm548 = vcmask 1043456
      %v550 = vsel %vm548, %v521, 0
      %552 = vmatprep.subr.bf16.mxu0 0
      %553 = vmatpush1.bf16.msra.mxu0 0
      %554 = vmatprep.subr.bf16.mxu0 0
      %555 = vmatpush1.bf16.msra.mxu0 0
      %556 = vmatprep.subr.bf16.mxu0 0
      %557 = vmatpush1.bf16.msra.mxu0 0
      %558 = vmatprep.subr.bf16.mxu0 0
      %559 = vmatpush1.bf16.msra.mxu0 0
      %560 = vmatprep.subr.bf16.mxu0 0
      %561 = vmatpush1.bf16.msra.mxu0 0
      %562 = vmatprep.subr.bf16.mxu0 0
      %563 = vmatpush1.bf16.msra.mxu0 0
      %564 = vmatprep.subr.bf16.mxu0 0
      %565 = vmatpush1.bf16.msra.mxu0 %v550
      %566 = vmatprep.subr.bf16.mxu0 0
      %567 = vmatpush1.bf16.msra.mxu0 %v520
      %568 = vmatprep.subr.bf16.mxu0 0
      %569 = vmatpush2.bf16.msra.mxu0 0
      %570 = vmatprep.subr.bf16.mxu0 0
      %571 = vmatpush2.bf16.msra.mxu0 0
      %572 = vmatprep.subr.bf16.mxu0 0
      %573 = vmatpush2.bf16.msra.mxu0 0
      %574 = vmatprep.subr.bf16.mxu0 0
      %575 = vmatpush2.bf16.msra.mxu0 0
      %576 = vmatprep.subr.bf16.mxu0 0
      %577 = vmatpush2.bf16.msra.mxu0 0
      %578 = vmatprep.subr.bf16.mxu0 0
      %579 = vmatpush2.bf16.msra.mxu0 0
      %580 = vmatprep.subr.bf16.mxu0 0
      %581 = vmatpush2.bf16.msra.mxu0 0
      %582 = vmatprep.subr.bf16.mxu0 0
      %583 = vmatpush2.bf16.msra.mxu0 0
      %584 = vmatprep.mubr.bf16.mxu0 0
      %585 = vmatmul.mubr.bf16.gmra.mxu0 %v525
      %v586 = vpop.f32.mrf.mxu0
      %v587 = vadd.f32 %v512, %v586
      %v588 = vpop.f32.mrf.mxu0
      %v589 = vpop.f32.mrf.mxu0
      %v590 = vadd.f32 %v512, %v589
      %v591 = vpop.f32.mrf.mxu0
      %592 = vmatprep.mubr.bf16.mxu0 0
      %593 = vmatmul.mubr.bf16.gmra.mxu0 %v528
      %v594 = vpop.f32.mrf.mxu0
      %v595 = vadd.f32 %v512, %v594
      %v596 = vpop.f32.mrf.mxu0
      %v597 = vpop.f32.mrf.mxu0
      %v598 = vadd.f32 %v512, %v597
      %v599 = vpop.f32.mrf.mxu0
      %600 = vmatprep.mubr.bf16.mxu0 0
      %601 = vmatmul.mubr.bf16.gmra.mxu0 %v531
      %v602 = vpop.f32.mrf.mxu0
      %v603 = vadd.f32 %v512, %v602
      %v604 = vpop.f32.mrf.mxu0
      %v605 = vpop.f32.mrf.mxu0
      %v606 = vadd.f32 %v512, %v605
      %v607 = vpop.f32.mrf.mxu0
      %608 = vmatprep.mubr.bf16.mxu0 0
      %609 = vmatmul.mubr.bf16.gmra.mxu0 %v534
      %v610 = vpop.f32.mrf.mxu0
      %v611 = vadd.f32 %v512, %v610
      %v612 = vpop.f32.mrf.mxu0
      %v613 = vpop.f32.mrf.mxu0
      %v614 = vadd.f32 %v512, %v613
      %v615 = vpop.f32.mrf.mxu0
      %616 = vmatprep.mubr.bf16.mxu0 0
      %617 = vmatmul.mubr.bf16.gmra.mxu0 %v537
      %v618 = vpop.f32.mrf.mxu0
      %v619 = vadd.f32 %v512, %v618
      %v620 = vpop.f32.mrf.mxu0
      %v621 = vpop.f32.mrf.mxu0
      %v622 = vadd.f32 %v512, %v621
      %v623 = vpop.f32.mrf.mxu0
      %624 = vmatprep.mubr.bf16.mxu0 0
      %625 = vmatmul.mubr.bf16.gmra.mxu0 %v540
      %v626 = vpop.f32.mrf.mxu0
      %v627 = vadd.f32 %v512, %v626
      %v628 = vpop.f32.mrf.mxu0
      %v629 = vpop.f32.mrf.mxu0
      %v630 = vadd.f32 %v512, %v629
      %v631 = vpop.f32.mrf.mxu0
      %632 = vmatprep.mubr.bf16.mxu0 0
      %633 = vmatmul.mubr.bf16.gmra.mxu0 %v543
      %v634 = vpop.f32.mrf.mxu0
      %v635 = vadd.f32 %v512, %v634
      %v636 = vpop.f32.mrf.mxu0
      %v637 = vpop.f32.mrf.mxu0
      %v638 = vadd.f32 %v512, %v637
      %v639 = vpop.f32.mrf.mxu0
      %640 = vmatprep.mubr.bf16.mxu0 0
      %641 = vmatmul.mubr.bf16.gmra.mxu0 %v546
      %v642 = vpop.f32.mrf.mxu0
      %v643 = vadd.f32 %v512, %v642
      %v644 = vpop.f32.mrf.mxu0
      %v645 = vpop.f32.mrf.mxu0
      %v646 = vadd.f32 %v512, %v645
      %v647 = vpop.f32.mrf.mxu0
      %648 = vdwg.mxu0
      %v649 = vmin.f32 %v587, 20.0
      %v650 = vmin.f32 %v590, 20.0
      %v651 = vmin.f32 %v595, 20.0
      %v652 = vmin.f32 %v598, 20.0
      %v653 = vmin.f32 %v603, 20.0
      %v654 = vmin.f32 %v606, 20.0
      %v655 = vmin.f32 %v611, 20.0
      %v656 = vmin.f32 %v614, 20.0
      %v657 = vmin.f32 %v619, 20.0
      %v658 = vmin.f32 %v622, 20.0
      %v659 = vmin.f32 %v627, 20.0
      %v660 = vmin.f32 %v630, 20.0
      %v661 = vmin.f32 %v635, 20.0
      %v662 = vmin.f32 %v638, 20.0
      %v663 = vmin.f32 %v643, 20.0
      %v664 = vmin.f32 %v646, 20.0
      %v665 = vmul.f32 %v649, 1.442695
      %v666 = vpow.pop %v665
      %v667 = vmul.f32 %v650, 1.442695
      %v668 = vpow.pop %v667
      %v669 = vmul.f32 %v651, 1.442695
      %v670 = vpow.pop %v669
      %v671 = vmul.f32 %v652, 1.442695
      %v672 = vpow.pop %v671
      %v673 = vmul.f32 %v653, 1.442695
      %v674 = vpow.pop %v673
      %v675 = vmul.f32 %v654, 1.442695
      %v676 = vpow.pop %v675
      %v677 = vmul.f32 %v655, 1.442695
      %v678 = vpow.pop %v677
      %v679 = vmul.f32 %v656, 1.442695
      %v680 = vpow.pop %v679
      %v681 = vmul.f32 %v657, 1.442695
      %v682 = vpow.pop %v681
      %v683 = vmul.f32 %v658, 1.442695
      %v684 = vpow.pop %v683
      %v685 = vmul.f32 %v659, 1.442695
      %v686 = vpow.pop %v685
      %v687 = vmul.f32 %v660, 1.442695
      %v688 = vpow.pop %v687
      %v689 = vmul.f32 %v661, 1.442695
      %v690 = vpow.pop %v689
      %v691 = vmul.f32 %v662, 1.442695
      %v692 = vpow.pop %v691
      %v693 = vmul.f32 %v663, 1.442695
      %v694 = vpow.pop %v693
      %v695 = vmul.f32 %v664, 1.442695
      %v696 = vpow.pop %v695
      %v697 = vadd.f32 %v666, 2.0
      %v698 = vadd.f32 %v668, 2.0
      %v699 = vadd.f32 %v670, 2.0
      %v700 = vadd.f32 %v672, 2.0
      %v701 = vadd.f32 %v674, 2.0
      %v702 = vadd.f32 %v676, 2.0
      %v703 = vadd.f32 %v678, 2.0
      %v704 = vadd.f32 %v680, 2.0
      %v705 = vadd.f32 %v682, 2.0
      %v706 = vadd.f32 %v684, 2.0
      %v707 = vadd.f32 %v686, 2.0
      %v708 = vadd.f32 %v688, 2.0
      %v709 = vadd.f32 %v690, 2.0
      %v710 = vadd.f32 %v692, 2.0
      %v711 = vadd.f32 %v694, 2.0
      %v712 = vadd.f32 %v696, 2.0
      %v713 = vmul.f32 %v666, %v697
      %v714 = vmul.f32 %v668, %v698
      %v715 = vmul.f32 %v670, %v699
      %v716 = vmul.f32 %v672, %v700
      %v717 = vmul.f32 %v674, %v701
      %v718 = vmul.f32 %v676, %v702
      %v719 = vmul.f32 %v678, %v703
      %v720 = vmul.f32 %v680, %v704
      %v721 = vmul.f32 %v682, %v705
      %v722 = vmul.f32 %v684, %v706
      %v723 = vmul.f32 %v686, %v707
      %v724 = vmul.f32 %v688, %v708
      %v725 = vmul.f32 %v690, %v709
      %v726 = vmul.f32 %v692, %v710
      %v727 = vmul.f32 %v694, %v711
      %v728 = vmul.f32 %v696, %v712
      %v729 = vadd.f32 %v713, 2.0
      %v730 = vadd.f32 %v714, 2.0
      %v731 = vadd.f32 %v715, 2.0
      %v732 = vadd.f32 %v716, 2.0
      %v733 = vadd.f32 %v717, 2.0
      %v734 = vadd.f32 %v718, 2.0
      %v735 = vadd.f32 %v719, 2.0
      %v736 = vadd.f32 %v720, 2.0
      %v737 = vadd.f32 %v721, 2.0
      %v738 = vadd.f32 %v722, 2.0
      %v739 = vadd.f32 %v723, 2.0
      %v740 = vadd.f32 %v724, 2.0
      %v741 = vadd.f32 %v725, 2.0
      %v742 = vadd.f32 %v726, 2.0
      %v743 = vadd.f32 %v727, 2.0
      %v744 = vadd.f32 %v728, 2.0
      %v745 = vrcp.pop %v729
      %v746 = vrcp.pop %v730
      %v747 = vrcp.pop %v731
      %v748 = vrcp.pop %v732
      %v749 = vrcp.pop %v733
      %v750 = vrcp.pop %v734
      %v751 = vrcp.pop %v735
      %v752 = vrcp.pop %v736
      %v753 = vrcp.pop %v737
      %v754 = vrcp.pop %v738
      %v755 = vrcp.pop %v739
      %v756 = vrcp.pop %v740
      %v757 = vrcp.pop %v741
      %v758 = vrcp.pop %v742
      %v759 = vrcp.pop %v743
      %v760 = vrcp.pop %v744
      %v761 = vmul.f32 %v729, %v745
      %v762 = vmul.f32 %v730, %v746
      %v763 = vmul.f32 %v731, %v747
      %v764 = vmul.f32 %v732, %v748
      %v765 = vmul.f32 %v733, %v749
      %v766 = vmul.f32 %v734, %v750
      %v767 = vmul.f32 %v735, %v751
      %v768 = vmul.f32 %v736, %v752
      %v769 = vmul.f32 %v737, %v753
      %v770 = vmul.f32 %v738, %v754
      %v771 = vmul.f32 %v739, %v755
      %v772 = vmul.f32 %v740, %v756
      %v773 = vmul.f32 %v741, %v757
      %v774 = vmul.f32 %v742, %v758
      %v775 = vmul.f32 %v743, %v759
      %v776 = vmul.f32 %v744, %v760
      %v777 = vsub.f32 2.0, %v761
      %v778 = vsub.f32 2.0, %v762
      %v779 = vsub.f32 2.0, %v763
      %v780 = vsub.f32 2.0, %v764
      %v781 = vsub.f32 2.0, %v765
      %v782 = vsub.f32 2.0, %v766
      %v783 = vsub.f32 2.0, %v767
      %v784 = vsub.f32 2.0, %v768
      %v785 = vsub.f32 2.0, %v769
      %v786 = vsub.f32 2.0, %v770
      %v787 = vsub.f32 2.0, %v771
      %v788 = vsub.f32 2.0, %v772
      %v789 = vsub.f32 2.0, %v773
      %v790 = vsub.f32 2.0, %v774
      %v791 = vsub.f32 2.0, %v775
      %v792 = vsub.f32 2.0, %v776
      %v793 = vmul.f32 %v745, %v777
      %v794 = vmul.f32 %v746, %v778
      %v795 = vmul.f32 %v747, %v779
      %v796 = vmul.f32 %v748, %v780
      %v797 = vmul.f32 %v749, %v781
      %v798 = vmul.f32 %v750, %v782
      %v799 = vmul.f32 %v751, %v783
      %v800 = vmul.f32 %v752, %v784
      %v801 = vmul.f32 %v753, %v785
      %v802 = vmul.f32 %v754, %v786
      %v803 = vmul.f32 %v755, %v787
      %v804 = vmul.f32 %v756, %v788
      %v805 = vmul.f32 %v757, %v789
      %v806 = vmul.f32 %v758, %v790
      %v807 = vmul.f32 %v759, %v791
      %v808 = vmul.f32 %v760, %v792
      %v809 = vmul.f32 %v587, %v713
      %v810 = vmul.f32 %v590, %v714
      %v811 = vmul.f32 %v595, %v715
      %v812 = vmul.f32 %v598, %v716
      %v813 = vmul.f32 %v603, %v717
      %v814 = vmul.f32 %v606, %v718
      %v815 = vmul.f32 %v611, %v719
      %v816 = vmul.f32 %v614, %v720
      %v817 = vmul.f32 %v619, %v721
      %v818 = vmul.f32 %v622, %v722
      %v819 = vmul.f32 %v627, %v723
      %v820 = vmul.f32 %v630, %v724
      %v821 = vmul.f32 %v635, %v725
      %v822 = vmul.f32 %v638, %v726
      %v823 = vmul.f32 %v643, %v727
      %v824 = vmul.f32 %v646, %v728
      %v825 = vmul.f32 %v809, %v793
      %v826 = vmul.f32 %v810, %v794
      %v827 = vmul.f32 %v811, %v795
      %v828 = vmul.f32 %v812, %v796
      %v829 = vmul.f32 %v813, %v797
      %v830 = vmul.f32 %v814, %v798
      %v831 = vmul.f32 %v815, %v799
      %v832 = vmul.f32 %v816, %v800
      %v833 = vmul.f32 %v817, %v801
      %v834 = vmul.f32 %v818, %v802
      %v835 = vmul.f32 %v819, %v803
      %v836 = vmul.f32 %v820, %v804
      %v837 = vmul.f32 %v821, %v805
      %v838 = vmul.f32 %v822, %v806
      %v839 = vmul.f32 %v823, %v807
      %v840 = vmul.f32 %v824, %v808
      %v841 = vpack.c.bf16 %v826, %v825
      %v842 = vpack.c.bf16 %v828, %v827
      %v843 = vpack.c.bf16 %v830, %v829
      %v844 = vpack.c.bf16 %v832, %v831
      %v845 = vpack.c.bf16 %v834, %v833
      %v846 = vpack.c.bf16 %v836, %v835
      %v847 = vpack.c.bf16 %v838, %v837
      %v848 = vpack.c.bf16 %v840, %v839
      %v849 = vld [vmem:[%s4] sm:$0xf]
      %v850 = vld [vmem:[%s4 + $0x4] sm:$0xf]
      %v851 = vld [vmem:[%s4 + $0x8] sm:$0xf]
      %v852 = vld [vmem:[%s4 + $0xc] sm:$0xf]
      %v853 = vld [vmem:[%s5] sm:$0x1]
      %v855 = vlaneseq
      %v856 = vshrl.u32 %v855, 7
      %v857 = vsub.s32 0, %v856
      %v858 = vrot.slane %v853, %v857
      %v864 = vunpack.c.l.b16 %v849
      %v865 = vunpack.c.l.b16 %v850
      %v866 = vunpack.c.l.b16 %v851
      %v867 = vunpack.c.l.b16 %v852
      %v868 = vpack.c.b16 %v865, %v864
      %v869 = vpack.c.b16 %v867, %v866
      %vm872 = vcmask 261120
      %v874 = vsel %vm872, %v841, 0
      %v877 = vsel %vm872, %v842, 0
      %v880 = vsel %vm872, %v843, 0
      %v883 = vsel %vm872, %v844, 0
      %v886 = vsel %vm872, %v845, 0
      %v889 = vsel %vm872, %v846, 0
      %v892 = vsel %vm872, %v847, 0
      %v895 = vsel %vm872, %v848, 0
      %897 = vmatprep.subr.bf16.mxu0 0
      %898 = vmatpush1.bf16.msra.mxu0 0
      %899 = vmatprep.subr.bf16.mxu0 0
      %900 = vmatpush1.bf16.msra.mxu0 0
      %901 = vmatprep.subr.bf16.mxu0 0
      %902 = vmatpush1.bf16.msra.mxu0 0
      %903 = vmatprep.subr.bf16.mxu0 0
      %904 = vmatpush1.bf16.msra.mxu0 0
      %905 = vmatprep.subr.bf16.mxu0 0
      %906 = vmatpush1.bf16.msra.mxu0 0
      %907 = vmatprep.subr.bf16.mxu0 0
      %908 = vmatpush1.bf16.msra.mxu0 0
      %909 = vmatprep.subr.bf16.mxu0 0
      %910 = vmatpush1.bf16.msra.mxu0 %v869
      %911 = vmatprep.subr.bf16.mxu0 0
      %912 = vmatpush1.bf16.msra.mxu0 %v868
      %913 = vmatprep.subr.bf16.mxu0 0
      %914 = vmatpush2.bf16.msra.mxu0 0
      %915 = vmatprep.subr.bf16.mxu0 0
      %916 = vmatpush2.bf16.msra.mxu0 0
      %917 = vmatprep.subr.bf16.mxu0 0
      %918 = vmatpush2.bf16.msra.mxu0 0
      %919 = vmatprep.subr.bf16.mxu0 0
      %920 = vmatpush2.bf16.msra.mxu0 0
      %921 = vmatprep.subr.bf16.mxu0 0
      %922 = vmatpush2.bf16.msra.mxu0 0
      %923 = vmatprep.subr.bf16.mxu0 0
      %924 = vmatpush2.bf16.msra.mxu0 0
      %925 = vmatprep.subr.bf16.mxu0 0
      %926 = vmatpush2.bf16.msra.mxu0 0
      %927 = vmatprep.subr.bf16.mxu0 0
      %928 = vmatpush2.bf16.msra.mxu0 0
      %929 = vmatprep.mubr.bf16.mxu0 0
      %930 = vmatmul.mubr.bf16.gmra.mxu0 %v874
      %v931 = vpop.f32.mrf.mxu0
      %v932 = vadd.f32 %v858, %v931
      %v933 = vpop.f32.mrf.mxu0
      %v934 = vpop.f32.mrf.mxu0
      %v935 = vadd.f32 %v858, %v934
      %v936 = vpop.f32.mrf.mxu0
      %937 = vmatprep.mubr.bf16.mxu0 0
      %938 = vmatmul.mubr.bf16.gmra.mxu0 %v877
      %v939 = vpop.f32.mrf.mxu0
      %v940 = vadd.f32 %v858, %v939
      %v941 = vpop.f32.mrf.mxu0
      %v942 = vpop.f32.mrf.mxu0
      %v943 = vadd.f32 %v858, %v942
      %v944 = vpop.f32.mrf.mxu0
      %945 = vmatprep.mubr.bf16.mxu0 0
      %946 = vmatmul.mubr.bf16.gmra.mxu0 %v880
      %v947 = vpop.f32.mrf.mxu0
      %v948 = vadd.f32 %v858, %v947
      %v949 = vpop.f32.mrf.mxu0
      %v950 = vpop.f32.mrf.mxu0
      %v951 = vadd.f32 %v858, %v950
      %v952 = vpop.f32.mrf.mxu0
      %953 = vmatprep.mubr.bf16.mxu0 0
      %954 = vmatmul.mubr.bf16.gmra.mxu0 %v883
      %v955 = vpop.f32.mrf.mxu0
      %v956 = vadd.f32 %v858, %v955
      %v957 = vpop.f32.mrf.mxu0
      %v958 = vpop.f32.mrf.mxu0
      %v959 = vadd.f32 %v858, %v958
      %v960 = vpop.f32.mrf.mxu0
      %961 = vmatprep.mubr.bf16.mxu0 0
      %962 = vmatmul.mubr.bf16.gmra.mxu0 %v886
      %v963 = vpop.f32.mrf.mxu0
      %v964 = vadd.f32 %v858, %v963
      %v965 = vpop.f32.mrf.mxu0
      %v966 = vpop.f32.mrf.mxu0
      %v967 = vadd.f32 %v858, %v966
      %v968 = vpop.f32.mrf.mxu0
      %969 = vmatprep.mubr.bf16.mxu0 0
      %970 = vmatmul.mubr.bf16.gmra.mxu0 %v889
      %v971 = vpop.f32.mrf.mxu0
      %v972 = vadd.f32 %v858, %v971
      %v973 = vpop.f32.mrf.mxu0
      %v974 = vpop.f32.mrf.mxu0
      %v975 = vadd.f32 %v858, %v974
      %v976 = vpop.f32.mrf.mxu0
      %977 = vmatprep.mubr.bf16.mxu0 0
      %978 = vmatmul.mubr.bf16.gmra.mxu0 %v892
      %v979 = vpop.f32.mrf.mxu0
      %v980 = vadd.f32 %v858, %v979
      %v981 = vpop.f32.mrf.mxu0
      %v982 = vpop.f32.mrf.mxu0
      %v983 = vadd.f32 %v858, %v982
      %v984 = vpop.f32.mrf.mxu0
      %985 = vmatprep.mubr.bf16.mxu0 0
      %986 = vmatmul.mubr.bf16.gmra.mxu0 %v895
      %v987 = vpop.f32.mrf.mxu0
      %v988 = vadd.f32 %v858, %v987
      %v989 = vpop.f32.mrf.mxu0
      %v990 = vpop.f32.mrf.mxu0
      %v991 = vadd.f32 %v858, %v990
      %v992 = vpop.f32.mrf.mxu0
      %993 = vdwg.mxu0
      %v994 = vmin.f32 %v932, 20.0
      %v995 = vmin.f32 %v935, 20.0
      %v996 = vmin.f32 %v940, 20.0
      %v997 = vmin.f32 %v943, 20.0
      %v998 = vmin.f32 %v948, 20.0
      %v999 = vmin.f32 %v951, 20.0
      %v1000 = vmin.f32 %v956, 20.0
      %v1001 = vmin.f32 %v959, 20.0
      %v1002 = vmin.f32 %v964, 20.0
      %v1003 = vmin.f32 %v967, 20.0
      %v1004 = vmin.f32 %v972, 20.0
      %v1005 = vmin.f32 %v975, 20.0
      %v1006 = vmin.f32 %v980, 20.0
      %v1007 = vmin.f32 %v983, 20.0
      %v1008 = vmin.f32 %v988, 20.0
      %v1009 = vmin.f32 %v991, 20.0
      %v1010 = vmul.f32 %v994, 1.442695
      %v1011 = vpow.pop %v1010
      %v1012 = vmul.f32 %v995, 1.442695
      %v1013 = vpow.pop %v1012
      %v1014 = vmul.f32 %v996, 1.442695
      %v1015 = vpow.pop %v1014
      %v1016 = vmul.f32 %v997, 1.442695
      %v1017 = vpow.pop %v1016
      %v1018 = vmul.f32 %v998, 1.442695
      %v1019 = vpow.pop %v1018
      %v1020 = vmul.f32 %v999, 1.442695
      %v1021 = vpow.pop %v1020
      %v1022 = vmul.f32 %v1000, 1.442695
      %v1023 = vpow.pop %v1022
      %v1024 = vmul.f32 %v1001, 1.442695
      %v1025 = vpow.pop %v1024
      %v1026 = vmul.f32 %v1002, 1.442695
      %v1027 = vpow.pop %v1026
      %v1028 = vmul.f32 %v1003, 1.442695
      %v1029 = vpow.pop %v1028
      %v1030 = vmul.f32 %v1004, 1.442695
      %v1031 = vpow.pop %v1030
      %v1032 = vmul.f32 %v1005, 1.442695
      %v1033 = vpow.pop %v1032
      %v1034 = vmul.f32 %v1006, 1.442695
      %v1035 = vpow.pop %v1034
      %v1036 = vmul.f32 %v1007, 1.442695
      %v1037 = vpow.pop %v1036
      %v1038 = vmul.f32 %v1008, 1.442695
      %v1039 = vpow.pop %v1038
      %v1040 = vmul.f32 %v1009, 1.442695
      %v1041 = vpow.pop %v1040
      %v1042 = vadd.f32 %v1011, 2.0
      %v1043 = vadd.f32 %v1013, 2.0
      %v1044 = vadd.f32 %v1015, 2.0
      %v1045 = vadd.f32 %v1017, 2.0
      %v1046 = vadd.f32 %v1019, 2.0
      %v1047 = vadd.f32 %v1021, 2.0
      %v1048 = vadd.f32 %v1023, 2.0
      %v1049 = vadd.f32 %v1025, 2.0
      %v1050 = vadd.f32 %v1027, 2.0
      %v1051 = vadd.f32 %v1029, 2.0
      %v1052 = vadd.f32 %v1031, 2.0
      %v1053 = vadd.f32 %v1033, 2.0
      %v1054 = vadd.f32 %v1035, 2.0
      %v1055 = vadd.f32 %v1037, 2.0
      %v1056 = vadd.f32 %v1039, 2.0
      %v1057 = vadd.f32 %v1041, 2.0
      %v1058 = vmul.f32 %v1011, %v1042
      %v1059 = vmul.f32 %v1013, %v1043
      %v1060 = vmul.f32 %v1015, %v1044
      %v1061 = vmul.f32 %v1017, %v1045
      %v1062 = vmul.f32 %v1019, %v1046
      %v1063 = vmul.f32 %v1021, %v1047
      %v1064 = vmul.f32 %v1023, %v1048
      %v1065 = vmul.f32 %v1025, %v1049
      %v1066 = vmul.f32 %v1027, %v1050
      %v1067 = vmul.f32 %v1029, %v1051
      %v1068 = vmul.f32 %v1031, %v1052
      %v1069 = vmul.f32 %v1033, %v1053
      %v1070 = vmul.f32 %v1035, %v1054
      %v1071 = vmul.f32 %v1037, %v1055
      %v1072 = vmul.f32 %v1039, %v1056
      %v1073 = vmul.f32 %v1041, %v1057
      %v1074 = vadd.f32 %v1058, 2.0
      %v1075 = vadd.f32 %v1059, 2.0
      %v1076 = vadd.f32 %v1060, 2.0
      %v1077 = vadd.f32 %v1061, 2.0
      %v1078 = vadd.f32 %v1062, 2.0
      %v1079 = vadd.f32 %v1063, 2.0
      %v1080 = vadd.f32 %v1064, 2.0
      %v1081 = vadd.f32 %v1065, 2.0
      %v1082 = vadd.f32 %v1066, 2.0
      %v1083 = vadd.f32 %v1067, 2.0
      %v1084 = vadd.f32 %v1068, 2.0
      %v1085 = vadd.f32 %v1069, 2.0
      %v1086 = vadd.f32 %v1070, 2.0
      %v1087 = vadd.f32 %v1071, 2.0
      %v1088 = vadd.f32 %v1072, 2.0
      %v1089 = vadd.f32 %v1073, 2.0
      %v1090 = vrcp.pop %v1074
      %v1091 = vrcp.pop %v1075
      %v1092 = vrcp.pop %v1076
      %v1093 = vrcp.pop %v1077
      %v1094 = vrcp.pop %v1078
      %v1095 = vrcp.pop %v1079
      %v1096 = vrcp.pop %v1080
      %v1097 = vrcp.pop %v1081
      %v1098 = vrcp.pop %v1082
      %v1099 = vrcp.pop %v1083
      %v1100 = vrcp.pop %v1084
      %v1101 = vrcp.pop %v1085
      %v1102 = vrcp.pop %v1086
      %v1103 = vrcp.pop %v1087
      %v1104 = vrcp.pop %v1088
      %v1105 = vrcp.pop %v1089
      %v1106 = vmul.f32 %v1074, %v1090
      %v1107 = vmul.f32 %v1075, %v1091
      %v1108 = vmul.f32 %v1076, %v1092
      %v1109 = vmul.f32 %v1077, %v1093
      %v1110 = vmul.f32 %v1078, %v1094
      %v1111 = vmul.f32 %v1079, %v1095
      %v1112 = vmul.f32 %v1080, %v1096
      %v1113 = vmul.f32 %v1081, %v1097
      %v1114 = vmul.f32 %v1082, %v1098
      %v1115 = vmul.f32 %v1083, %v1099
      %v1116 = vmul.f32 %v1084, %v1100
      %v1117 = vmul.f32 %v1085, %v1101
      %v1118 = vmul.f32 %v1086, %v1102
      %v1119 = vmul.f32 %v1087, %v1103
      %v1120 = vmul.f32 %v1088, %v1104
      %v1121 = vmul.f32 %v1089, %v1105
      %v1122 = vsub.f32 2.0, %v1106
      %v1123 = vsub.f32 2.0, %v1107
      %v1124 = vsub.f32 2.0, %v1108
      %v1125 = vsub.f32 2.0, %v1109
      %v1126 = vsub.f32 2.0, %v1110
      %v1127 = vsub.f32 2.0, %v1111
      %v1128 = vsub.f32 2.0, %v1112
      %v1129 = vsub.f32 2.0, %v1113
      %v1130 = vsub.f32 2.0, %v1114
      %v1131 = vsub.f32 2.0, %v1115
      %v1132 = vsub.f32 2.0, %v1116
      %v1133 = vsub.f32 2.0, %v1117
      %v1134 = vsub.f32 2.0, %v1118
      %v1135 = vsub.f32 2.0, %v1119
      %v1136 = vsub.f32 2.0, %v1120
      %v1137 = vsub.f32 2.0, %v1121
      %v1138 = vmul.f32 %v1090, %v1122
      %v1139 = vmul.f32 %v1091, %v1123
      %v1140 = vmul.f32 %v1092, %v1124
      %v1141 = vmul.f32 %v1093, %v1125
      %v1142 = vmul.f32 %v1094, %v1126
      %v1143 = vmul.f32 %v1095, %v1127
      %v1144 = vmul.f32 %v1096, %v1128
      %v1145 = vmul.f32 %v1097, %v1129
      %v1146 = vmul.f32 %v1098, %v1130
      %v1147 = vmul.f32 %v1099, %v1131
      %v1148 = vmul.f32 %v1100, %v1132
      %v1149 = vmul.f32 %v1101, %v1133
      %v1150 = vmul.f32 %v1102, %v1134
      %v1151 = vmul.f32 %v1103, %v1135
      %v1152 = vmul.f32 %v1104, %v1136
      %v1153 = vmul.f32 %v1105, %v1137
      %v1154 = vmul.f32 %v932, %v1058
      %v1155 = vmul.f32 %v935, %v1059
      %v1156 = vmul.f32 %v940, %v1060
      %v1157 = vmul.f32 %v943, %v1061
      %v1158 = vmul.f32 %v948, %v1062
      %v1159 = vmul.f32 %v951, %v1063
      %v1160 = vmul.f32 %v956, %v1064
      %v1161 = vmul.f32 %v959, %v1065
      %v1162 = vmul.f32 %v964, %v1066
      %v1163 = vmul.f32 %v967, %v1067
      %v1164 = vmul.f32 %v972, %v1068
      %v1165 = vmul.f32 %v975, %v1069
      %v1166 = vmul.f32 %v980, %v1070
      %v1167 = vmul.f32 %v983, %v1071
      %v1168 = vmul.f32 %v988, %v1072
      %v1169 = vmul.f32 %v991, %v1073
      %v1170 = vmul.f32 %v1154, %v1138
      %v1171 = vmul.f32 %v1155, %v1139
      %v1172 = vmul.f32 %v1156, %v1140
      %v1173 = vmul.f32 %v1157, %v1141
      %v1174 = vmul.f32 %v1158, %v1142
      %v1175 = vmul.f32 %v1159, %v1143
      %v1176 = vmul.f32 %v1160, %v1144
      %v1177 = vmul.f32 %v1161, %v1145
      %v1178 = vmul.f32 %v1162, %v1146
      %v1179 = vmul.f32 %v1163, %v1147
      %v1180 = vmul.f32 %v1164, %v1148
      %v1181 = vmul.f32 %v1165, %v1149
      %v1182 = vmul.f32 %v1166, %v1150
      %v1183 = vmul.f32 %v1167, %v1151
      %v1184 = vmul.f32 %v1168, %v1152
      %v1185 = vmul.f32 %v1169, %v1153
      %v1186 = vpack.c.bf16 %v1171, %v1170
      %v1187 = vpack.c.bf16 %v1173, %v1172
      %v1188 = vpack.c.bf16 %v1175, %v1174
      %v1189 = vpack.c.bf16 %v1177, %v1176
      %v1190 = vpack.c.bf16 %v1179, %v1178
      %v1191 = vpack.c.bf16 %v1181, %v1180
      %v1192 = vpack.c.bf16 %v1183, %v1182
      %v1193 = vpack.c.bf16 %v1185, %v1184
      %v1194 = vld [vmem:[%s6] sm:$0xf]
      %v1195 = vld [vmem:[%s6 + $0x4] sm:$0xf]
      %v1196 = vld [vmem:[%s6 + $0x8] sm:$0xf]
      %v1197 = vld [vmem:[%s6 + $0xc] sm:$0xf]
      %v1198 = vld [vmem:[%s7] sm:$0x1]
      %v1200 = vlaneseq
      %v1201 = vshrl.u32 %v1200, 7
      %v1202 = vsub.s32 0, %v1201
      %v1203 = vrot.slane %v1198, %v1202
      %v1209 = vunpack.c.l.b16 %v1194
      %v1210 = vunpack.c.l.b16 %v1195
      %v1211 = vunpack.c.l.b16 %v1196
      %v1212 = vunpack.c.l.b16 %v1197
      %v1213 = vpack.c.b16 %v1210, %v1209
      %v1214 = vpack.c.b16 %v1212, %v1211
      %v1218 = vsel %vm872, %v1186, 0
      %v1221 = vsel %vm872, %v1187, 0
      %v1224 = vsel %vm872, %v1188, 0
      %v1227 = vsel %vm872, %v1189, 0
      %v1230 = vsel %vm872, %v1190, 0
      %v1233 = vsel %vm872, %v1191, 0
      %v1236 = vsel %vm872, %v1192, 0
      %v1239 = vsel %vm872, %v1193, 0
      %1241 = vmatprep.subr.bf16.mxu0 0
      %1242 = vmatpush1.bf16.msra.mxu0 0
      %1243 = vmatprep.subr.bf16.mxu0 0
      %1244 = vmatpush1.bf16.msra.mxu0 0
      %1245 = vmatprep.subr.bf16.mxu0 0
      %1246 = vmatpush1.bf16.msra.mxu0 0
      %1247 = vmatprep.subr.bf16.mxu0 0
      %1248 = vmatpush1.bf16.msra.mxu0 0
      %1249 = vmatprep.subr.bf16.mxu0 0
      %1250 = vmatpush1.bf16.msra.mxu0 0
      %1251 = vmatprep.subr.bf16.mxu0 0
      %1252 = vmatpush1.bf16.msra.mxu0 0
      %1253 = vmatprep.subr.bf16.mxu0 0
      %1254 = vmatpush1.bf16.msra.mxu0 %v1214
      %1255 = vmatprep.subr.bf16.mxu0 0
      %1256 = vmatpush1.bf16.msra.mxu0 %v1213
      %1257 = vmatprep.subr.bf16.mxu0 0
      %1258 = vmatpush2.bf16.msra.mxu0 0
      %1259 = vmatprep.subr.bf16.mxu0 0
      %1260 = vmatpush2.bf16.msra.mxu0 0
      %1261 = vmatprep.subr.bf16.mxu0 0
      %1262 = vmatpush2.bf16.msra.mxu0 0
      %1263 = vmatprep.subr.bf16.mxu0 0
      %1264 = vmatpush2.bf16.msra.mxu0 0
      %1265 = vmatprep.subr.bf16.mxu0 0
      %1266 = vmatpush2.bf16.msra.mxu0 0
      %1267 = vmatprep.subr.bf16.mxu0 0
      %1268 = vmatpush2.bf16.msra.mxu0 0
      %1269 = vmatprep.subr.bf16.mxu0 0
      %1270 = vmatpush2.bf16.msra.mxu0 0
      %1271 = vmatprep.subr.bf16.mxu0 0
      %1272 = vmatpush2.bf16.msra.mxu0 0
      %1273 = vmatprep.mubr.bf16.mxu0 0
      %1274 = vmatmul.mubr.bf16.gmra.mxu0 %v1218
      %v1275 = vpop.f32.mrf.mxu0
      %v1276 = vadd.f32 %v1203, %v1275
      %v1277 = vpop.f32.mrf.mxu0
      %v1278 = vpop.f32.mrf.mxu0
      %v1279 = vadd.f32 %v1203, %v1278
      %v1280 = vpop.f32.mrf.mxu0
      %1281 = vmatprep.mubr.bf16.mxu0 0
      %1282 = vmatmul.mubr.bf16.gmra.mxu0 %v1221
      %v1283 = vpop.f32.mrf.mxu0
      %v1284 = vadd.f32 %v1203, %v1283
      %v1285 = vpop.f32.mrf.mxu0
      %v1286 = vpop.f32.mrf.mxu0
      %v1287 = vadd.f32 %v1203, %v1286
      %v1288 = vpop.f32.mrf.mxu0
      %1289 = vmatprep.mubr.bf16.mxu0 0
      %1290 = vmatmul.mubr.bf16.gmra.mxu0 %v1224
      %v1291 = vpop.f32.mrf.mxu0
      %v1292 = vadd.f32 %v1203, %v1291
      %v1293 = vpop.f32.mrf.mxu0
      %v1294 = vpop.f32.mrf.mxu0
      %v1295 = vadd.f32 %v1203, %v1294
      %v1296 = vpop.f32.mrf.mxu0
      %1297 = vmatprep.mubr.bf16.mxu0 0
      %1298 = vmatmul.mubr.bf16.gmra.mxu0 %v1227
      %v1299 = vpop.f32.mrf.mxu0
      %v1300 = vadd.f32 %v1203, %v1299
      %v1301 = vpop.f32.mrf.mxu0
      %v1302 = vpop.f32.mrf.mxu0
      %v1303 = vadd.f32 %v1203, %v1302
      %v1304 = vpop.f32.mrf.mxu0
      %1305 = vmatprep.mubr.bf16.mxu0 0
      %1306 = vmatmul.mubr.bf16.gmra.mxu0 %v1230
      %v1307 = vpop.f32.mrf.mxu0
      %v1308 = vadd.f32 %v1203, %v1307
      %v1309 = vpop.f32.mrf.mxu0
      %v1310 = vpop.f32.mrf.mxu0
      %v1311 = vadd.f32 %v1203, %v1310
      %v1312 = vpop.f32.mrf.mxu0
      %1313 = vmatprep.mubr.bf16.mxu0 0
      %1314 = vmatmul.mubr.bf16.gmra.mxu0 %v1233
      %v1315 = vpop.f32.mrf.mxu0
      %v1316 = vadd.f32 %v1203, %v1315
      %v1317 = vpop.f32.mrf.mxu0
      %v1318 = vpop.f32.mrf.mxu0
      %v1319 = vadd.f32 %v1203, %v1318
      %v1320 = vpop.f32.mrf.mxu0
      %1321 = vmatprep.mubr.bf16.mxu0 0
      %1322 = vmatmul.mubr.bf16.gmra.mxu0 %v1236
      %v1323 = vpop.f32.mrf.mxu0
      %v1324 = vadd.f32 %v1203, %v1323
      %v1325 = vpop.f32.mrf.mxu0
      %v1326 = vpop.f32.mrf.mxu0
      %v1327 = vadd.f32 %v1203, %v1326
      %v1328 = vpop.f32.mrf.mxu0
      %1329 = vmatprep.mubr.bf16.mxu0 0
      %1330 = vmatmul.mubr.bf16.gmra.mxu0 %v1239
      %v1331 = vpop.f32.mrf.mxu0
      %v1332 = vadd.f32 %v1203, %v1331
      %v1333 = vpop.f32.mrf.mxu0
      %v1334 = vpop.f32.mrf.mxu0
      %v1335 = vadd.f32 %v1203, %v1334
      %v1336 = vpop.f32.mrf.mxu0
      %1337 = vdwg.mxu0
      %v1338 = vmin.f32 %v1276, 20.0
      %v1339 = vmin.f32 %v1279, 20.0
      %v1340 = vmin.f32 %v1284, 20.0
      %v1341 = vmin.f32 %v1287, 20.0
      %v1342 = vmin.f32 %v1292, 20.0
      %v1343 = vmin.f32 %v1295, 20.0
      %v1344 = vmin.f32 %v1300, 20.0
      %v1345 = vmin.f32 %v1303, 20.0
      %v1346 = vmin.f32 %v1308, 20.0
      %v1347 = vmin.f32 %v1311, 20.0
      %v1348 = vmin.f32 %v1316, 20.0
      %v1349 = vmin.f32 %v1319, 20.0
      %v1350 = vmin.f32 %v1324, 20.0
      %v1351 = vmin.f32 %v1327, 20.0
      %v1352 = vmin.f32 %v1332, 20.0
      %v1353 = vmin.f32 %v1335, 20.0
      %v1354 = vmul.f32 %v1338, 1.442695
      %v1355 = vpow.pop %v1354
      %v1356 = vmul.f32 %v1339, 1.442695
      %v1357 = vpow.pop %v1356
      %v1358 = vmul.f32 %v1340, 1.442695
      %v1359 = vpow.pop %v1358
      %v1360 = vmul.f32 %v1341, 1.442695
      %v1361 = vpow.pop %v1360
      %v1362 = vmul.f32 %v1342, 1.442695
      %v1363 = vpow.pop %v1362
      %v1364 = vmul.f32 %v1343, 1.442695
      %v1365 = vpow.pop %v1364
      %v1366 = vmul.f32 %v1344, 1.442695
      %v1367 = vpow.pop %v1366
      %v1368 = vmul.f32 %v1345, 1.442695
      %v1369 = vpow.pop %v1368
      %v1370 = vmul.f32 %v1346, 1.442695
      %v1371 = vpow.pop %v1370
      %v1372 = vmul.f32 %v1347, 1.442695
      %v1373 = vpow.pop %v1372
      %v1374 = vmul.f32 %v1348, 1.442695
      %v1375 = vpow.pop %v1374
      %v1376 = vmul.f32 %v1349, 1.442695
      %v1377 = vpow.pop %v1376
      %v1378 = vmul.f32 %v1350, 1.442695
      %v1379 = vpow.pop %v1378
      %v1380 = vmul.f32 %v1351, 1.442695
      %v1381 = vpow.pop %v1380
      %v1382 = vmul.f32 %v1352, 1.442695
      %v1383 = vpow.pop %v1382
      %v1384 = vmul.f32 %v1353, 1.442695
      %v1385 = vpow.pop %v1384
      %v1386 = vadd.f32 %v1355, 2.0
      %v1387 = vadd.f32 %v1357, 2.0
      %v1388 = vadd.f32 %v1359, 2.0
      %v1389 = vadd.f32 %v1361, 2.0
      %v1390 = vadd.f32 %v1363, 2.0
      %v1391 = vadd.f32 %v1365, 2.0
      %v1392 = vadd.f32 %v1367, 2.0
      %v1393 = vadd.f32 %v1369, 2.0
      %v1394 = vadd.f32 %v1371, 2.0
      %v1395 = vadd.f32 %v1373, 2.0
      %v1396 = vadd.f32 %v1375, 2.0
      %v1397 = vadd.f32 %v1377, 2.0
      %v1398 = vadd.f32 %v1379, 2.0
      %v1399 = vadd.f32 %v1381, 2.0
      %v1400 = vadd.f32 %v1383, 2.0
      %v1401 = vadd.f32 %v1385, 2.0
      %v1402 = vmul.f32 %v1355, %v1386
      %v1403 = vmul.f32 %v1357, %v1387
      %v1404 = vmul.f32 %v1359, %v1388
      %v1405 = vmul.f32 %v1361, %v1389
      %v1406 = vmul.f32 %v1363, %v1390
      %v1407 = vmul.f32 %v1365, %v1391
      %v1408 = vmul.f32 %v1367, %v1392
      %v1409 = vmul.f32 %v1369, %v1393
      %v1410 = vmul.f32 %v1371, %v1394
      %v1411 = vmul.f32 %v1373, %v1395
      %v1412 = vmul.f32 %v1375, %v1396
      %v1413 = vmul.f32 %v1377, %v1397
      %v1414 = vmul.f32 %v1379, %v1398
      %v1415 = vmul.f32 %v1381, %v1399
      %v1416 = vmul.f32 %v1383, %v1400
      %v1417 = vmul.f32 %v1385, %v1401
      %v1418 = vadd.f32 %v1402, 2.0
      %v1419 = vadd.f32 %v1403, 2.0
      %v1420 = vadd.f32 %v1404, 2.0
      %v1421 = vadd.f32 %v1405, 2.0
      %v1422 = vadd.f32 %v1406, 2.0
      %v1423 = vadd.f32 %v1407, 2.0
      %v1424 = vadd.f32 %v1408, 2.0
      %v1425 = vadd.f32 %v1409, 2.0
      %v1426 = vadd.f32 %v1410, 2.0
      %v1427 = vadd.f32 %v1411, 2.0
      %v1428 = vadd.f32 %v1412, 2.0
      %v1429 = vadd.f32 %v1413, 2.0
      %v1430 = vadd.f32 %v1414, 2.0
      %v1431 = vadd.f32 %v1415, 2.0
      %v1432 = vadd.f32 %v1416, 2.0
      %v1433 = vadd.f32 %v1417, 2.0
      %v1434 = vrcp.pop %v1418
      %v1435 = vrcp.pop %v1419
      %v1436 = vrcp.pop %v1420
      %v1437 = vrcp.pop %v1421
      %v1438 = vrcp.pop %v1422
      %v1439 = vrcp.pop %v1423
      %v1440 = vrcp.pop %v1424
      %v1441 = vrcp.pop %v1425
      %v1442 = vrcp.pop %v1426
      %v1443 = vrcp.pop %v1427
      %v1444 = vrcp.pop %v1428
      %v1445 = vrcp.pop %v1429
      %v1446 = vrcp.pop %v1430
      %v1447 = vrcp.pop %v1431
      %v1448 = vrcp.pop %v1432
      %v1449 = vrcp.pop %v1433
      %v1450 = vmul.f32 %v1418, %v1434
      %v1451 = vmul.f32 %v1419, %v1435
      %v1452 = vmul.f32 %v1420, %v1436
      %v1453 = vmul.f32 %v1421, %v1437
      %v1454 = vmul.f32 %v1422, %v1438
      %v1455 = vmul.f32 %v1423, %v1439
      %v1456 = vmul.f32 %v1424, %v1440
      %v1457 = vmul.f32 %v1425, %v1441
      %v1458 = vmul.f32 %v1426, %v1442
      %v1459 = vmul.f32 %v1427, %v1443
      %v1460 = vmul.f32 %v1428, %v1444
      %v1461 = vmul.f32 %v1429, %v1445
      %v1462 = vmul.f32 %v1430, %v1446
      %v1463 = vmul.f32 %v1431, %v1447
      %v1464 = vmul.f32 %v1432, %v1448
      %v1465 = vmul.f32 %v1433, %v1449
      %v1466 = vsub.f32 2.0, %v1450
      %v1467 = vsub.f32 2.0, %v1451
      %v1468 = vsub.f32 2.0, %v1452
      %v1469 = vsub.f32 2.0, %v1453
      %v1470 = vsub.f32 2.0, %v1454
      %v1471 = vsub.f32 2.0, %v1455
      %v1472 = vsub.f32 2.0, %v1456
      %v1473 = vsub.f32 2.0, %v1457
      %v1474 = vsub.f32 2.0, %v1458
      %v1475 = vsub.f32 2.0, %v1459
      %v1476 = vsub.f32 2.0, %v1460
      %v1477 = vsub.f32 2.0, %v1461
      %v1478 = vsub.f32 2.0, %v1462
      %v1479 = vsub.f32 2.0, %v1463
      %v1480 = vsub.f32 2.0, %v1464
      %v1481 = vsub.f32 2.0, %v1465
      %v1482 = vmul.f32 %v1434, %v1466
      %v1483 = vmul.f32 %v1435, %v1467
      %v1484 = vmul.f32 %v1436, %v1468
      %v1485 = vmul.f32 %v1437, %v1469
      %v1486 = vmul.f32 %v1438, %v1470
      %v1487 = vmul.f32 %v1439, %v1471
      %v1488 = vmul.f32 %v1440, %v1472
      %v1489 = vmul.f32 %v1441, %v1473
      %v1490 = vmul.f32 %v1442, %v1474
      %v1491 = vmul.f32 %v1443, %v1475
      %v1492 = vmul.f32 %v1444, %v1476
      %v1493 = vmul.f32 %v1445, %v1477
      %v1494 = vmul.f32 %v1446, %v1478
      %v1495 = vmul.f32 %v1447, %v1479
      %v1496 = vmul.f32 %v1448, %v1480
      %v1497 = vmul.f32 %v1449, %v1481
      %v1498 = vmul.f32 %v1276, %v1402
      %v1499 = vmul.f32 %v1279, %v1403
      %v1500 = vmul.f32 %v1284, %v1404
      %v1501 = vmul.f32 %v1287, %v1405
      %v1502 = vmul.f32 %v1292, %v1406
      %v1503 = vmul.f32 %v1295, %v1407
      %v1504 = vmul.f32 %v1300, %v1408
      %v1505 = vmul.f32 %v1303, %v1409
      %v1506 = vmul.f32 %v1308, %v1410
      %v1507 = vmul.f32 %v1311, %v1411
      %v1508 = vmul.f32 %v1316, %v1412
      %v1509 = vmul.f32 %v1319, %v1413
      %v1510 = vmul.f32 %v1324, %v1414
      %v1511 = vmul.f32 %v1327, %v1415
      %v1512 = vmul.f32 %v1332, %v1416
      %v1513 = vmul.f32 %v1335, %v1417
      %v1514 = vmul.f32 %v1498, %v1482
      %v1515 = vmul.f32 %v1499, %v1483
      %v1516 = vmul.f32 %v1500, %v1484
      %v1517 = vmul.f32 %v1501, %v1485
      %v1518 = vmul.f32 %v1502, %v1486
      %v1519 = vmul.f32 %v1503, %v1487
      %v1520 = vmul.f32 %v1504, %v1488
      %v1521 = vmul.f32 %v1505, %v1489
      %v1522 = vmul.f32 %v1506, %v1490
      %v1523 = vmul.f32 %v1507, %v1491
      %v1524 = vmul.f32 %v1508, %v1492
      %v1525 = vmul.f32 %v1509, %v1493
      %v1526 = vmul.f32 %v1510, %v1494
      %v1527 = vmul.f32 %v1511, %v1495
      %v1528 = vmul.f32 %v1512, %v1496
      %v1529 = vmul.f32 %v1513, %v1497
      %v1530 = vld [vmem:[%s8] sm:$0x1]
      %v1532 = vlaneseq
      %v1533 = vshrl.u32 %v1532, 7
      %v1534 = vsub.s32 0, %v1533
      %v1535 = vrot.slane %v1530, %v1534
      %v1537 = vmul.f32 %v1514, %v1535
      %v1538 = vmul.f32 %v1515, %v1535
      %v1539 = vmul.f32 %v1516, %v1535
      %v1540 = vmul.f32 %v1517, %v1535
      %v1541 = vmul.f32 %v1518, %v1535
      %v1542 = vmul.f32 %v1519, %v1535
      %v1543 = vmul.f32 %v1520, %v1535
      %v1544 = vmul.f32 %v1521, %v1535
      %v1545 = vmul.f32 %v1522, %v1535
      %v1546 = vmul.f32 %v1523, %v1535
      %v1547 = vmul.f32 %v1524, %v1535
      %v1548 = vmul.f32 %v1525, %v1535
      %v1549 = vmul.f32 %v1526, %v1535
      %v1550 = vmul.f32 %v1527, %v1535
      %v1551 = vmul.f32 %v1528, %v1535
      %v1552 = vmul.f32 %v1529, %v1535
      %v1553 = vsel %vm872, %v1537, 0.0
      %1554 = vadd.xlane.f32.xlu0 %v1553
      %v1555 = vpop.xlane.xlu0 %1554
      %v1556 = vsel %vm872, %v1538, 0.0
      %1557 = vadd.xlane.f32.xlu0 %v1556
      %v1558 = vpop.xlane.xlu0 %1557
      %v1559 = vsel %vm872, %v1539, 0.0
      %1560 = vadd.xlane.f32.xlu0 %v1559
      %v1561 = vpop.xlane.xlu0 %1560
      %v1562 = vsel %vm872, %v1540, 0.0
      %1563 = vadd.xlane.f32.xlu0 %v1562
      %v1564 = vpop.xlane.xlu0 %1563
      %v1565 = vsel %vm872, %v1541, 0.0
      %1566 = vadd.xlane.f32.xlu0 %v1565
      %v1567 = vpop.xlane.xlu0 %1566
      %v1568 = vsel %vm872, %v1542, 0.0
      %1569 = vadd.xlane.f32.xlu0 %v1568
      %v1570 = vpop.xlane.xlu0 %1569
      %v1571 = vsel %vm872, %v1543, 0.0
      %1572 = vadd.xlane.f32.xlu0 %v1571
      %v1573 = vpop.xlane.xlu0 %1572
      %v1574 = vsel %vm872, %v1544, 0.0
      %1575 = vadd.xlane.f32.xlu0 %v1574
      %v1576 = vpop.xlane.xlu0 %1575
      %v1577 = vsel %vm872, %v1545, 0.0
      %1578 = vadd.xlane.f32.xlu0 %v1577
      %v1579 = vpop.xlane.xlu0 %1578
      %v1580 = vsel %vm872, %v1546, 0.0
      %1581 = vadd.xlane.f32.xlu0 %v1580
      %v1582 = vpop.xlane.xlu0 %1581
      %v1583 = vsel %vm872, %v1547, 0.0
      %1584 = vadd.xlane.f32.xlu0 %v1583
      %v1585 = vpop.xlane.xlu0 %1584
      %v1586 = vsel %vm872, %v1548, 0.0
      %1587 = vadd.xlane.f32.xlu0 %v1586
      %v1588 = vpop.xlane.xlu0 %1587
      %v1589 = vsel %vm872, %v1549, 0.0
      %1590 = vadd.xlane.f32.xlu0 %v1589
      %v1591 = vpop.xlane.xlu0 %1590
      %v1592 = vsel %vm872, %v1550, 0.0
      %1593 = vadd.xlane.f32.xlu0 %v1592
      %v1594 = vpop.xlane.xlu0 %1593
      %v1595 = vsel %vm872, %v1551, 0.0
      %1596 = vadd.xlane.f32.xlu0 %v1595
      %v1597 = vpop.xlane.xlu0 %1596
      %v1598 = vsel %vm872, %v1552, 0.0
      %1599 = vadd.xlane.f32.xlu0 %v1598
      %v1600 = vpop.xlane.xlu0 %1599
      %s1601 = scalar_lea.vmem %s2, 12
      %v1602 = vld [vmem:[%s1601] sm:$0xf]
      %v1603 = vld [vmem:[%s1601 + $0x4] sm:$0xf]
      %v1604 = vld [vmem:[%s1601 + $0x8] sm:$0xf]
      %s1605 = scalar_lea.vmem %s3, 1
      %v1606 = vld [vmem:[%s1605] sm:$0x1]
      %v1608 = vlaneseq
      %v1609 = vshrl.u32 %v1608, 7
      %v1610 = vsub.s32 0, %v1609
      %v1611 = vrot.slane %v1606, %v1610
      %v1616 = vunpack.c.l.b16 %v1602
      %v1617 = vunpack.c.l.b16 %v1603
      %v1618 = vunpack.c.l.b16 %v1604
      %v1619 = vpack.c.b16 %v1617, %v1616
      %v1620 = vpack.c.b16 %v1618, %v1618
      %v1623 = vsel %vm548, %v1620, 0
      %1625 = vmatprep.subr.bf16.mxu0 0
      %1626 = vmatpush1.bf16.msra.mxu0 0
      %1627 = vmatprep.subr.bf16.mxu0 0
      %1628 = vmatpush1.bf16.msra.mxu0 0
      %1629 = vmatprep.subr.bf16.mxu0 0
      %1630 = vmatpush1.bf16.msra.mxu0 0
      %1631 = vmatprep.subr.bf16.mxu0 0
      %1632 = vmatpush1.bf16.msra.mxu0 0
      %1633 = vmatprep.subr.bf16.mxu0 0
      %1634 = vmatpush1.bf16.msra.mxu0 0
      %1635 = vmatprep.subr.bf16.mxu0 0
      %1636 = vmatpush1.bf16.msra.mxu0 0
      %1637 = vmatprep.subr.bf16.mxu0 0
      %1638 = vmatpush1.bf16.msra.mxu0 %v1623
      %1639 = vmatprep.subr.bf16.mxu0 0
      %1640 = vmatpush1.bf16.msra.mxu0 %v1619
      %1641 = vmatprep.subr.bf16.mxu0 0
      %1642 = vmatpush2.bf16.msra.mxu0 0
      %1643 = vmatprep.subr.bf16.mxu0 0
      %1644 = vmatpush2.bf16.msra.mxu0 0
      %1645 = vmatprep.subr.bf16.mxu0 0
      %1646 = vmatpush2.bf16.msra.mxu0 0
      %1647 = vmatprep.subr.bf16.mxu0 0
      %1648 = vmatpush2.bf16.msra.mxu0 0
      %1649 = vmatprep.subr.bf16.mxu0 0
      %1650 = vmatpush2.bf16.msra.mxu0 0
      %1651 = vmatprep.subr.bf16.mxu0 0
      %1652 = vmatpush2.bf16.msra.mxu0 0
      %1653 = vmatprep.subr.bf16.mxu0 0
      %1654 = vmatpush2.bf16.msra.mxu0 0
      %1655 = vmatprep.subr.bf16.mxu0 0
      %1656 = vmatpush2.bf16.msra.mxu0 0
      %1657 = vmatprep.mubr.bf16.mxu0 0
      %1658 = vmatmul.mubr.bf16.gmra.mxu0 %v525
      %v1659 = vpop.f32.mrf.mxu0
      %v1660 = vadd.f32 %v1611, %v1659
      %v1661 = vpop.f32.mrf.mxu0
      %v1662 = vpop.f32.mrf.mxu0
      %v1663 = vadd.f32 %v1611, %v1662
      %v1664 = vpop.f32.mrf.mxu0
      %1665 = vmatprep.mubr.bf16.mxu0 0
      %1666 = vmatmul.mubr.bf16.gmra.mxu0 %v528
      %v1667 = vpop.f32.mrf.mxu0
      %v1668 = vadd.f32 %v1611, %v1667
      %v1669 = vpop.f32.mrf.mxu0
      %v1670 = vpop.f32.mrf.mxu0
      %v1671 = vadd.f32 %v1611, %v1670
      %v1672 = vpop.f32.mrf.mxu0
      %1673 = vmatprep.mubr.bf16.mxu0 0
      %1674 = vmatmul.mubr.bf16.gmra.mxu0 %v531
      %v1675 = vpop.f32.mrf.mxu0
      %v1676 = vadd.f32 %v1611, %v1675
      %v1677 = vpop.f32.mrf.mxu0
      %v1678 = vpop.f32.mrf.mxu0
      %v1679 = vadd.f32 %v1611, %v1678
      %v1680 = vpop.f32.mrf.mxu0
      %1681 = vmatprep.mubr.bf16.mxu0 0
      %1682 = vmatmul.mubr.bf16.gmra.mxu0 %v534
      %v1683 = vpop.f32.mrf.mxu0
      %v1684 = vadd.f32 %v1611, %v1683
      %v1685 = vpop.f32.mrf.mxu0
      %v1686 = vpop.f32.mrf.mxu0
      %v1687 = vadd.f32 %v1611, %v1686
      %v1688 = vpop.f32.mrf.mxu0
      %1689 = vmatprep.mubr.bf16.mxu0 0
      %1690 = vmatmul.mubr.bf16.gmra.mxu0 %v537
      %v1691 = vpop.f32.mrf.mxu0
      %v1692 = vadd.f32 %v1611, %v1691
      %v1693 = vpop.f32.mrf.mxu0
      %v1694 = vpop.f32.mrf.mxu0
      %v1695 = vadd.f32 %v1611, %v1694
      %v1696 = vpop.f32.mrf.mxu0
      %1697 = vmatprep.mubr.bf16.mxu0 0
      %1698 = vmatmul.mubr.bf16.gmra.mxu0 %v540
      %v1699 = vpop.f32.mrf.mxu0
      %v1700 = vadd.f32 %v1611, %v1699
      %v1701 = vpop.f32.mrf.mxu0
      %v1702 = vpop.f32.mrf.mxu0
      %v1703 = vadd.f32 %v1611, %v1702
      %v1704 = vpop.f32.mrf.mxu0
      %1705 = vmatprep.mubr.bf16.mxu0 0
      %1706 = vmatmul.mubr.bf16.gmra.mxu0 %v543
      %v1707 = vpop.f32.mrf.mxu0
      %v1708 = vadd.f32 %v1611, %v1707
      %v1709 = vpop.f32.mrf.mxu0
      %v1710 = vpop.f32.mrf.mxu0
      %v1711 = vadd.f32 %v1611, %v1710
      %v1712 = vpop.f32.mrf.mxu0
      %1713 = vmatprep.mubr.bf16.mxu0 0
      %1714 = vmatmul.mubr.bf16.gmra.mxu0 %v546
      %v1715 = vpop.f32.mrf.mxu0
      %v1716 = vadd.f32 %v1611, %v1715
      %v1717 = vpop.f32.mrf.mxu0
      %v1718 = vpop.f32.mrf.mxu0
      %v1719 = vadd.f32 %v1611, %v1718
      %v1720 = vpop.f32.mrf.mxu0
      %1721 = vdwg.mxu0
      %v1722 = vmin.f32 %v1660, 20.0
      %v1723 = vmin.f32 %v1663, 20.0
      %v1724 = vmin.f32 %v1668, 20.0
      %v1725 = vmin.f32 %v1671, 20.0
      %v1726 = vmin.f32 %v1676, 20.0
      %v1727 = vmin.f32 %v1679, 20.0
      %v1728 = vmin.f32 %v1684, 20.0
      %v1729 = vmin.f32 %v1687, 20.0
      %v1730 = vmin.f32 %v1692, 20.0
      %v1731 = vmin.f32 %v1695, 20.0
      %v1732 = vmin.f32 %v1700, 20.0
      %v1733 = vmin.f32 %v1703, 20.0
      %v1734 = vmin.f32 %v1708, 20.0
      %v1735 = vmin.f32 %v1711, 20.0
      %v1736 = vmin.f32 %v1716, 20.0
      %v1737 = vmin.f32 %v1719, 20.0
      %v1738 = vmul.f32 %v1722, 1.442695
      %v1739 = vpow.pop %v1738
      %v1740 = vmul.f32 %v1723, 1.442695
      %v1741 = vpow.pop %v1740
      %v1742 = vmul.f32 %v1724, 1.442695
      %v1743 = vpow.pop %v1742
      %v1744 = vmul.f32 %v1725, 1.442695
      %v1745 = vpow.pop %v1744
      %v1746 = vmul.f32 %v1726, 1.442695
      %v1747 = vpow.pop %v1746
      %v1748 = vmul.f32 %v1727, 1.442695
      %v1749 = vpow.pop %v1748
      %v1750 = vmul.f32 %v1728, 1.442695
      %v1751 = vpow.pop %v1750
      %v1752 = vmul.f32 %v1729, 1.442695
      %v1753 = vpow.pop %v1752
      %v1754 = vmul.f32 %v1730, 1.442695
      %v1755 = vpow.pop %v1754
      %v1756 = vmul.f32 %v1731, 1.442695
      %v1757 = vpow.pop %v1756
      %v1758 = vmul.f32 %v1732, 1.442695
      %v1759 = vpow.pop %v1758
      %v1760 = vmul.f32 %v1733, 1.442695
      %v1761 = vpow.pop %v1760
      %v1762 = vmul.f32 %v1734, 1.442695
      %v1763 = vpow.pop %v1762
      %v1764 = vmul.f32 %v1735, 1.442695
      %v1765 = vpow.pop %v1764
      %v1766 = vmul.f32 %v1736, 1.442695
      %v1767 = vpow.pop %v1766
      %v1768 = vmul.f32 %v1737, 1.442695
      %v1769 = vpow.pop %v1768
      %v1770 = vadd.f32 %v1739, 2.0
      %v1771 = vadd.f32 %v1741, 2.0
      %v1772 = vadd.f32 %v1743, 2.0
      %v1773 = vadd.f32 %v1745, 2.0
      %v1774 = vadd.f32 %v1747, 2.0
      %v1775 = vadd.f32 %v1749, 2.0
      %v1776 = vadd.f32 %v1751, 2.0
      %v1777 = vadd.f32 %v1753, 2.0
      %v1778 = vadd.f32 %v1755, 2.0
      %v1779 = vadd.f32 %v1757, 2.0
      %v1780 = vadd.f32 %v1759, 2.0
      %v1781 = vadd.f32 %v1761, 2.0
      %v1782 = vadd.f32 %v1763, 2.0
      %v1783 = vadd.f32 %v1765, 2.0
      %v1784 = vadd.f32 %v1767, 2.0
      %v1785 = vadd.f32 %v1769, 2.0
      %v1786 = vmul.f32 %v1739, %v1770
      %v1787 = vmul.f32 %v1741, %v1771
      %v1788 = vmul.f32 %v1743, %v1772
      %v1789 = vmul.f32 %v1745, %v1773
      %v1790 = vmul.f32 %v1747, %v1774
      %v1791 = vmul.f32 %v1749, %v1775
      %v1792 = vmul.f32 %v1751, %v1776
      %v1793 = vmul.f32 %v1753, %v1777
      %v1794 = vmul.f32 %v1755, %v1778
      %v1795 = vmul.f32 %v1757, %v1779
      %v1796 = vmul.f32 %v1759, %v1780
      %v1797 = vmul.f32 %v1761, %v1781
      %v1798 = vmul.f32 %v1763, %v1782
      %v1799 = vmul.f32 %v1765, %v1783
      %v1800 = vmul.f32 %v1767, %v1784
      %v1801 = vmul.f32 %v1769, %v1785
      %v1802 = vadd.f32 %v1786, 2.0
      %v1803 = vadd.f32 %v1787, 2.0
      %v1804 = vadd.f32 %v1788, 2.0
      %v1805 = vadd.f32 %v1789, 2.0
      %v1806 = vadd.f32 %v1790, 2.0
      %v1807 = vadd.f32 %v1791, 2.0
      %v1808 = vadd.f32 %v1792, 2.0
      %v1809 = vadd.f32 %v1793, 2.0
      %v1810 = vadd.f32 %v1794, 2.0
      %v1811 = vadd.f32 %v1795, 2.0
      %v1812 = vadd.f32 %v1796, 2.0
      %v1813 = vadd.f32 %v1797, 2.0
      %v1814 = vadd.f32 %v1798, 2.0
      %v1815 = vadd.f32 %v1799, 2.0
      %v1816 = vadd.f32 %v1800, 2.0
      %v1817 = vadd.f32 %v1801, 2.0
      %v1818 = vrcp.pop %v1802
      %v1819 = vrcp.pop %v1803
      %v1820 = vrcp.pop %v1804
      %v1821 = vrcp.pop %v1805
      %v1822 = vrcp.pop %v1806
      %v1823 = vrcp.pop %v1807
      %v1824 = vrcp.pop %v1808
      %v1825 = vrcp.pop %v1809
      %v1826 = vrcp.pop %v1810
      %v1827 = vrcp.pop %v1811
      %v1828 = vrcp.pop %v1812
      %v1829 = vrcp.pop %v1813
      %v1830 = vrcp.pop %v1814
      %v1831 = vrcp.pop %v1815
      %v1832 = vrcp.pop %v1816
      %v1833 = vrcp.pop %v1817
      %v1834 = vmul.f32 %v1802, %v1818
      %v1835 = vmul.f32 %v1803, %v1819
      %v1836 = vmul.f32 %v1804, %v1820
      %v1837 = vmul.f32 %v1805, %v1821
      %v1838 = vmul.f32 %v1806, %v1822
      %v1839 = vmul.f32 %v1807, %v1823
      %v1840 = vmul.f32 %v1808, %v1824
      %v1841 = vmul.f32 %v1809, %v1825
      %v1842 = vmul.f32 %v1810, %v1826
      %v1843 = vmul.f32 %v1811, %v1827
      %v1844 = vmul.f32 %v1812, %v1828
      %v1845 = vmul.f32 %v1813, %v1829
      %v1846 = vmul.f32 %v1814, %v1830
      %v1847 = vmul.f32 %v1815, %v1831
      %v1848 = vmul.f32 %v1816, %v1832
      %v1849 = vmul.f32 %v1817, %v1833
      %v1850 = vsub.f32 2.0, %v1834
      %v1851 = vsub.f32 2.0, %v1835
      %v1852 = vsub.f32 2.0, %v1836
      %v1853 = vsub.f32 2.0, %v1837
      %v1854 = vsub.f32 2.0, %v1838
      %v1855 = vsub.f32 2.0, %v1839
      %v1856 = vsub.f32 2.0, %v1840
      %v1857 = vsub.f32 2.0, %v1841
      %v1858 = vsub.f32 2.0, %v1842
      %v1859 = vsub.f32 2.0, %v1843
      %v1860 = vsub.f32 2.0, %v1844
      %v1861 = vsub.f32 2.0, %v1845
      %v1862 = vsub.f32 2.0, %v1846
      %v1863 = vsub.f32 2.0, %v1847
      %v1864 = vsub.f32 2.0, %v1848
      %v1865 = vsub.f32 2.0, %v1849
      %v1866 = vmul.f32 %v1818, %v1850
      %v1867 = vmul.f32 %v1819, %v1851
      %v1868 = vmul.f32 %v1820, %v1852
      %v1869 = vmul.f32 %v1821, %v1853
      %v1870 = vmul.f32 %v1822, %v1854
      %v1871 = vmul.f32 %v1823, %v1855
      %v1872 = vmul.f32 %v1824, %v1856
      %v1873 = vmul.f32 %v1825, %v1857
      %v1874 = vmul.f32 %v1826, %v1858
      %v1875 = vmul.f32 %v1827, %v1859
      %v1876 = vmul.f32 %v1828, %v1860
      %v1877 = vmul.f32 %v1829, %v1861
      %v1878 = vmul.f32 %v1830, %v1862
      %v1879 = vmul.f32 %v1831, %v1863
      %v1880 = vmul.f32 %v1832, %v1864
      %v1881 = vmul.f32 %v1833, %v1865
      %v1882 = vmul.f32 %v1660, %v1786
      %v1883 = vmul.f32 %v1663, %v1787
      %v1884 = vmul.f32 %v1668, %v1788
      %v1885 = vmul.f32 %v1671, %v1789
      %v1886 = vmul.f32 %v1676, %v1790
      %v1887 = vmul.f32 %v1679, %v1791
      %v1888 = vmul.f32 %v1684, %v1792
      %v1889 = vmul.f32 %v1687, %v1793
      %v1890 = vmul.f32 %v1692, %v1794
      %v1891 = vmul.f32 %v1695, %v1795
      %v1892 = vmul.f32 %v1700, %v1796
      %v1893 = vmul.f32 %v1703, %v1797
      %v1894 = vmul.f32 %v1708, %v1798
      %v1895 = vmul.f32 %v1711, %v1799
      %v1896 = vmul.f32 %v1716, %v1800
      %v1897 = vmul.f32 %v1719, %v1801
      %v1898 = vmul.f32 %v1882, %v1866
      %v1899 = vmul.f32 %v1883, %v1867
      %v1900 = vmul.f32 %v1884, %v1868
      %v1901 = vmul.f32 %v1885, %v1869
      %v1902 = vmul.f32 %v1886, %v1870
      %v1903 = vmul.f32 %v1887, %v1871
      %v1904 = vmul.f32 %v1888, %v1872
      %v1905 = vmul.f32 %v1889, %v1873
      %v1906 = vmul.f32 %v1890, %v1874
      %v1907 = vmul.f32 %v1891, %v1875
      %v1908 = vmul.f32 %v1892, %v1876
      %v1909 = vmul.f32 %v1893, %v1877
      %v1910 = vmul.f32 %v1894, %v1878
      %v1911 = vmul.f32 %v1895, %v1879
      %v1912 = vmul.f32 %v1896, %v1880
      %v1913 = vmul.f32 %v1897, %v1881
      %v1914 = vpack.c.bf16 %v1899, %v1898
      %v1915 = vpack.c.bf16 %v1901, %v1900
      %v1916 = vpack.c.bf16 %v1903, %v1902
      %v1917 = vpack.c.bf16 %v1905, %v1904
      %v1918 = vpack.c.bf16 %v1907, %v1906
      %v1919 = vpack.c.bf16 %v1909, %v1908
      %v1920 = vpack.c.bf16 %v1911, %v1910
      %v1921 = vpack.c.bf16 %v1913, %v1912
      %s1922 = scalar_lea.vmem %s4, 16
      %v1923 = vld [vmem:[%s1922] sm:$0xf]
      %v1924 = vld [vmem:[%s1922 + $0x4] sm:$0xf]
      %v1925 = vld [vmem:[%s1922 + $0x8] sm:$0xf]
      %v1926 = vld [vmem:[%s1922 + $0xc] sm:$0xf]
      %s1927 = scalar_lea.vmem %s5, 1
      %v1928 = vld [vmem:[%s1927] sm:$0x1]
      %v1930 = vlaneseq
      %v1931 = vshrl.u32 %v1930, 7
      %v1932 = vsub.s32 0, %v1931
      %v1933 = vrot.slane %v1928, %v1932
      %v1939 = vunpack.c.l.b16 %v1923
      %v1940 = vunpack.c.l.b16 %v1924
      %v1941 = vunpack.c.l.b16 %v1925
      %v1942 = vunpack.c.l.b16 %v1926
      %v1943 = vpack.c.b16 %v1940, %v1939
      %v1944 = vpack.c.b16 %v1942, %v1941
      %v1948 = vsel %vm872, %v1914, 0
      %v1951 = vsel %vm872, %v1915, 0
      %v1954 = vsel %vm872, %v1916, 0
      %v1957 = vsel %vm872, %v1917, 0
      %v1960 = vsel %vm872, %v1918, 0
      %v1963 = vsel %vm872, %v1919, 0
      %v1966 = vsel %vm872, %v1920, 0
      %v1969 = vsel %vm872, %v1921, 0
      %1971 = vmatprep.subr.bf16.mxu0 0
      %1972 = vmatpush1.bf16.msra.mxu0 0
      %1973 = vmatprep.subr.bf16.mxu0 0
      %1974 = vmatpush1.bf16.msra.mxu0 0
      %1975 = vmatprep.subr.bf16.mxu0 0
      %1976 = vmatpush1.bf16.msra.mxu0 0
      %1977 = vmatprep.subr.bf16.mxu0 0
      %1978 = vmatpush1.bf16.msra.mxu0 0
      %1979 = vmatprep.subr.bf16.mxu0 0
      %1980 = vmatpush1.bf16.msra.mxu0 0
      %1981 = vmatprep.subr.bf16.mxu0 0
      %1982 = vmatpush1.bf16.msra.mxu0 0
      %1983 = vmatprep.subr.bf16.mxu0 0
      %1984 = vmatpush1.bf16.msra.mxu0 %v1944
      %1985 = vmatprep.subr.bf16.mxu0 0
      %1986 = vmatpush1.bf16.msra.mxu0 %v1943
      %1987 = vmatprep.subr.bf16.mxu0 0
      %1988 = vmatpush2.bf16.msra.mxu0 0
      %1989 = vmatprep.subr.bf16.mxu0 0
      %1990 = vmatpush2.bf16.msra.mxu0 0
      %1991 = vmatprep.subr.bf16.mxu0 0
      %1992 = vmatpush2.bf16.msra.mxu0 0
      %1993 = vmatprep.subr.bf16.mxu0 0
      %1994 = vmatpush2.bf16.msra.mxu0 0
      %1995 = vmatprep.subr.bf16.mxu0 0
      %1996 = vmatpush2.bf16.msra.mxu0 0
      %1997 = vmatprep.subr.bf16.mxu0 0
      %1998 = vmatpush2.bf16.msra.mxu0 0
      %1999 = vmatprep.subr.bf16.mxu0 0
      %2000 = vmatpush2.bf16.msra.mxu0 0
      %2001 = vmatprep.subr.bf16.mxu0 0
      %2002 = vmatpush2.bf16.msra.mxu0 0
      %2003 = vmatprep.mubr.bf16.mxu0 0
      %2004 = vmatmul.mubr.bf16.gmra.mxu0 %v1948
      %v2005 = vpop.f32.mrf.mxu0
      %v2006 = vadd.f32 %v1933, %v2005
      %v2007 = vpop.f32.mrf.mxu0
      %v2008 = vpop.f32.mrf.mxu0
      %v2009 = vadd.f32 %v1933, %v2008
      %v2010 = vpop.f32.mrf.mxu0
      %2011 = vmatprep.mubr.bf16.mxu0 0
      %2012 = vmatmul.mubr.bf16.gmra.mxu0 %v1951
      %v2013 = vpop.f32.mrf.mxu0
      %v2014 = vadd.f32 %v1933, %v2013
      %v2015 = vpop.f32.mrf.mxu0
      %v2016 = vpop.f32.mrf.mxu0
      %v2017 = vadd.f32 %v1933, %v2016
      %v2018 = vpop.f32.mrf.mxu0
      %2019 = vmatprep.mubr.bf16.mxu0 0
      %2020 = vmatmul.mubr.bf16.gmra.mxu0 %v1954
      %v2021 = vpop.f32.mrf.mxu0
      %v2022 = vadd.f32 %v1933, %v2021
      %v2023 = vpop.f32.mrf.mxu0
      %v2024 = vpop.f32.mrf.mxu0
      %v2025 = vadd.f32 %v1933, %v2024
      %v2026 = vpop.f32.mrf.mxu0
      %2027 = vmatprep.mubr.bf16.mxu0 0
      %2028 = vmatmul.mubr.bf16.gmra.mxu0 %v1957
      %v2029 = vpop.f32.mrf.mxu0
      %v2030 = vadd.f32 %v1933, %v2029
      %v2031 = vpop.f32.mrf.mxu0
      %v2032 = vpop.f32.mrf.mxu0
      %v2033 = vadd.f32 %v1933, %v2032
      %v2034 = vpop.f32.mrf.mxu0
      %2035 = vmatprep.mubr.bf16.mxu0 0
      %2036 = vmatmul.mubr.bf16.gmra.mxu0 %v1960
      %v2037 = vpop.f32.mrf.mxu0
      %v2038 = vadd.f32 %v1933, %v2037
      %v2039 = vpop.f32.mrf.mxu0
      %v2040 = vpop.f32.mrf.mxu0
      %v2041 = vadd.f32 %v1933, %v2040
      %v2042 = vpop.f32.mrf.mxu0
      %2043 = vmatprep.mubr.bf16.mxu0 0
      %2044 = vmatmul.mubr.bf16.gmra.mxu0 %v1963
      %v2045 = vpop.f32.mrf.mxu0
      %v2046 = vadd.f32 %v1933, %v2045
      %v2047 = vpop.f32.mrf.mxu0
      %v2048 = vpop.f32.mrf.mxu0
      %v2049 = vadd.f32 %v1933, %v2048
      %v2050 = vpop.f32.mrf.mxu0
      %2051 = vmatprep.mubr.bf16.mxu0 0
      %2052 = vmatmul.mubr.bf16.gmra.mxu0 %v1966
      %v2053 = vpop.f32.mrf.mxu0
      %v2054 = vadd.f32 %v1933, %v2053
      %v2055 = vpop.f32.mrf.mxu0
      %v2056 = vpop.f32.mrf.mxu0
      %v2057 = vadd.f32 %v1933, %v2056
      %v2058 = vpop.f32.mrf.mxu0
      %2059 = vmatprep.mubr.bf16.mxu0 0
      %2060 = vmatmul.mubr.bf16.gmra.mxu0 %v1969
      %v2061 = vpop.f32.mrf.mxu0
      %v2062 = vadd.f32 %v1933, %v2061
      %v2063 = vpop.f32.mrf.mxu0
      %v2064 = vpop.f32.mrf.mxu0
      %v2065 = vadd.f32 %v1933, %v2064
      %v2066 = vpop.f32.mrf.mxu0
      %2067 = vdwg.mxu0
      %v2068 = vmin.f32 %v2006, 20.0
      %v2069 = vmin.f32 %v2009, 20.0
      %v2070 = vmin.f32 %v2014, 20.0
      %v2071 = vmin.f32 %v2017, 20.0
      %v2072 = vmin.f32 %v2022, 20.0
      %v2073 = vmin.f32 %v2025, 20.0
      %v2074 = vmin.f32 %v2030, 20.0
      %v2075 = vmin.f32 %v2033, 20.0
      %v2076 = vmin.f32 %v2038, 20.0
      %v2077 = vmin.f32 %v2041, 20.0
      %v2078 = vmin.f32 %v2046, 20.0
      %v2079 = vmin.f32 %v2049, 20.0
      %v2080 = vmin.f32 %v2054, 20.0
      %v2081 = vmin.f32 %v2057, 20.0
      %v2082 = vmin.f32 %v2062, 20.0
      %v2083 = vmin.f32 %v2065, 20.0
      %v2084 = vmul.f32 %v2068, 1.442695
      %v2085 = vpow.pop %v2084
      %v2086 = vmul.f32 %v2069, 1.442695
      %v2087 = vpow.pop %v2086
      %v2088 = vmul.f32 %v2070, 1.442695
      %v2089 = vpow.pop %v2088
      %v2090 = vmul.f32 %v2071, 1.442695
      %v2091 = vpow.pop %v2090
      %v2092 = vmul.f32 %v2072, 1.442695
      %v2093 = vpow.pop %v2092
      %v2094 = vmul.f32 %v2073, 1.442695
      %v2095 = vpow.pop %v2094
      %v2096 = vmul.f32 %v2074, 1.442695
      %v2097 = vpow.pop %v2096
      %v2098 = vmul.f32 %v2075, 1.442695
      %v2099 = vpow.pop %v2098
      %v2100 = vmul.f32 %v2076, 1.442695
      %v2101 = vpow.pop %v2100
      %v2102 = vmul.f32 %v2077, 1.442695
      %v2103 = vpow.pop %v2102
      %v2104 = vmul.f32 %v2078, 1.442695
      %v2105 = vpow.pop %v2104
      %v2106 = vmul.f32 %v2079, 1.442695
      %v2107 = vpow.pop %v2106
      %v2108 = vmul.f32 %v2080, 1.442695
      %v2109 = vpow.pop %v2108
      %v2110 = vmul.f32 %v2081, 1.442695
      %v2111 = vpow.pop %v2110
      %v2112 = vmul.f32 %v2082, 1.442695
      %v2113 = vpow.pop %v2112
      %v2114 = vmul.f32 %v2083, 1.442695
      %v2115 = vpow.pop %v2114
      %v2116 = vadd.f32 %v2085, 2.0
      %v2117 = vadd.f32 %v2087, 2.0
      %v2118 = vadd.f32 %v2089, 2.0
      %v2119 = vadd.f32 %v2091, 2.0
      %v2120 = vadd.f32 %v2093, 2.0
      %v2121 = vadd.f32 %v2095, 2.0
      %v2122 = vadd.f32 %v2097, 2.0
      %v2123 = vadd.f32 %v2099, 2.0
      %v2124 = vadd.f32 %v2101, 2.0
      %v2125 = vadd.f32 %v2103, 2.0
      %v2126 = vadd.f32 %v2105, 2.0
      %v2127 = vadd.f32 %v2107, 2.0
      %v2128 = vadd.f32 %v2109, 2.0
      %v2129 = vadd.f32 %v2111, 2.0
      %v2130 = vadd.f32 %v2113, 2.0
      %v2131 = vadd.f32 %v2115, 2.0
      %v2132 = vmul.f32 %v2085, %v2116
      %v2133 = vmul.f32 %v2087, %v2117
      %v2134 = vmul.f32 %v2089, %v2118
      %v2135 = vmul.f32 %v2091, %v2119
      %v2136 = vmul.f32 %v2093, %v2120
      %v2137 = vmul.f32 %v2095, %v2121
      %v2138 = vmul.f32 %v2097, %v2122
      %v2139 = vmul.f32 %v2099, %v2123
      %v2140 = vmul.f32 %v2101, %v2124
      %v2141 = vmul.f32 %v2103, %v2125
      %v2142 = vmul.f32 %v2105, %v2126
      %v2143 = vmul.f32 %v2107, %v2127
      %v2144 = vmul.f32 %v2109, %v2128
      %v2145 = vmul.f32 %v2111, %v2129
      %v2146 = vmul.f32 %v2113, %v2130
      %v2147 = vmul.f32 %v2115, %v2131
      %v2148 = vadd.f32 %v2132, 2.0
      %v2149 = vadd.f32 %v2133, 2.0
      %v2150 = vadd.f32 %v2134, 2.0
      %v2151 = vadd.f32 %v2135, 2.0
      %v2152 = vadd.f32 %v2136, 2.0
      %v2153 = vadd.f32 %v2137, 2.0
      %v2154 = vadd.f32 %v2138, 2.0
      %v2155 = vadd.f32 %v2139, 2.0
      %v2156 = vadd.f32 %v2140, 2.0
      %v2157 = vadd.f32 %v2141, 2.0
      %v2158 = vadd.f32 %v2142, 2.0
      %v2159 = vadd.f32 %v2143, 2.0
      %v2160 = vadd.f32 %v2144, 2.0
      %v2161 = vadd.f32 %v2145, 2.0
      %v2162 = vadd.f32 %v2146, 2.0
      %v2163 = vadd.f32 %v2147, 2.0
      %v2164 = vrcp.pop %v2148
      %v2165 = vrcp.pop %v2149
      %v2166 = vrcp.pop %v2150
      %v2167 = vrcp.pop %v2151
      %v2168 = vrcp.pop %v2152
      %v2169 = vrcp.pop %v2153
      %v2170 = vrcp.pop %v2154
      %v2171 = vrcp.pop %v2155
      %v2172 = vrcp.pop %v2156
      %v2173 = vrcp.pop %v2157
      %v2174 = vrcp.pop %v2158
      %v2175 = vrcp.pop %v2159
      %v2176 = vrcp.pop %v2160
      %v2177 = vrcp.pop %v2161
      %v2178 = vrcp.pop %v2162
      %v2179 = vrcp.pop %v2163
      %v2180 = vmul.f32 %v2148, %v2164
      %v2181 = vmul.f32 %v2149, %v2165
      %v2182 = vmul.f32 %v2150, %v2166
      %v2183 = vmul.f32 %v2151, %v2167
      %v2184 = vmul.f32 %v2152, %v2168
      %v2185 = vmul.f32 %v2153, %v2169
      %v2186 = vmul.f32 %v2154, %v2170
      %v2187 = vmul.f32 %v2155, %v2171
      %v2188 = vmul.f32 %v2156, %v2172
      %v2189 = vmul.f32 %v2157, %v2173
      %v2190 = vmul.f32 %v2158, %v2174
      %v2191 = vmul.f32 %v2159, %v2175
      %v2192 = vmul.f32 %v2160, %v2176
      %v2193 = vmul.f32 %v2161, %v2177
      %v2194 = vmul.f32 %v2162, %v2178
      %v2195 = vmul.f32 %v2163, %v2179
      %v2196 = vsub.f32 2.0, %v2180
      %v2197 = vsub.f32 2.0, %v2181
      %v2198 = vsub.f32 2.0, %v2182
      %v2199 = vsub.f32 2.0, %v2183
      %v2200 = vsub.f32 2.0, %v2184
      %v2201 = vsub.f32 2.0, %v2185
      %v2202 = vsub.f32 2.0, %v2186
      %v2203 = vsub.f32 2.0, %v2187
      %v2204 = vsub.f32 2.0, %v2188
      %v2205 = vsub.f32 2.0, %v2189
      %v2206 = vsub.f32 2.0, %v2190
      %v2207 = vsub.f32 2.0, %v2191
      %v2208 = vsub.f32 2.0, %v2192
      %v2209 = vsub.f32 2.0, %v2193
      %v2210 = vsub.f32 2.0, %v2194
      %v2211 = vsub.f32 2.0, %v2195
      %v2212 = vmul.f32 %v2164, %v2196
      %v2213 = vmul.f32 %v2165, %v2197
      %v2214 = vmul.f32 %v2166, %v2198
      %v2215 = vmul.f32 %v2167, %v2199
      %v2216 = vmul.f32 %v2168, %v2200
      %v2217 = vmul.f32 %v2169, %v2201
      %v2218 = vmul.f32 %v2170, %v2202
      %v2219 = vmul.f32 %v2171, %v2203
      %v2220 = vmul.f32 %v2172, %v2204
      %v2221 = vmul.f32 %v2173, %v2205
      %v2222 = vmul.f32 %v2174, %v2206
      %v2223 = vmul.f32 %v2175, %v2207
      %v2224 = vmul.f32 %v2176, %v2208
      %v2225 = vmul.f32 %v2177, %v2209
      %v2226 = vmul.f32 %v2178, %v2210
      %v2227 = vmul.f32 %v2179, %v2211
      %v2228 = vmul.f32 %v2006, %v2132
      %v2229 = vmul.f32 %v2009, %v2133
      %v2230 = vmul.f32 %v2014, %v2134
      %v2231 = vmul.f32 %v2017, %v2135
      %v2232 = vmul.f32 %v2022, %v2136
      %v2233 = vmul.f32 %v2025, %v2137
      %v2234 = vmul.f32 %v2030, %v2138
      %v2235 = vmul.f32 %v2033, %v2139
      %v2236 = vmul.f32 %v2038, %v2140
      %v2237 = vmul.f32 %v2041, %v2141
      %v2238 = vmul.f32 %v2046, %v2142
      %v2239 = vmul.f32 %v2049, %v2143
      %v2240 = vmul.f32 %v2054, %v2144
      %v2241 = vmul.f32 %v2057, %v2145
      %v2242 = vmul.f32 %v2062, %v2146
      %v2243 = vmul.f32 %v2065, %v2147
      %v2244 = vmul.f32 %v2228, %v2212
      %v2245 = vmul.f32 %v2229, %v2213
      %v2246 = vmul.f32 %v2230, %v2214
      %v2247 = vmul.f32 %v2231, %v2215
      %v2248 = vmul.f32 %v2232, %v2216
      %v2249 = vmul.f32 %v2233, %v2217
      %v2250 = vmul.f32 %v2234, %v2218
      %v2251 = vmul.f32 %v2235, %v2219
      %v2252 = vmul.f32 %v2236, %v2220
      %v2253 = vmul.f32 %v2237, %v2221
      %v2254 = vmul.f32 %v2238, %v2222
      %v2255 = vmul.f32 %v2239, %v2223
      %v2256 = vmul.f32 %v2240, %v2224
      %v2257 = vmul.f32 %v2241, %v2225
      %v2258 = vmul.f32 %v2242, %v2226
      %v2259 = vmul.f32 %v2243, %v2227
      %v2260 = vpack.c.bf16 %v2245, %v2244
      %v2261 = vpack.c.bf16 %v2247, %v2246
      %v2262 = vpack.c.bf16 %v2249, %v2248
      %v2263 = vpack.c.bf16 %v2251, %v2250
      %v2264 = vpack.c.bf16 %v2253, %v2252
      %v2265 = vpack.c.bf16 %v2255, %v2254
      %v2266 = vpack.c.bf16 %v2257, %v2256
      %v2267 = vpack.c.bf16 %v2259, %v2258
      %s2268 = scalar_lea.vmem %s6, 16
      %v2269 = vld [vmem:[%s2268] sm:$0xf]
      %v2270 = vld [vmem:[%s2268 + $0x4] sm:$0xf]
      %v2271 = vld [vmem:[%s2268 + $0x8] sm:$0xf]
      %v2272 = vld [vmem:[%s2268 + $0xc] sm:$0xf]
      %s2273 = scalar_lea.vmem %s7, 1
      %v2274 = vld [vmem:[%s2273] sm:$0x1]
      %v2276 = vlaneseq
      %v2277 = vshrl.u32 %v2276, 7
      %v2278 = vsub.s32 0, %v2277
      %v2279 = vrot.slane %v2274, %v2278
      %v2285 = vunpack.c.l.b16 %v2269
      %v2286 = vunpack.c.l.b16 %v2270
      %v2287 = vunpack.c.l.b16 %v2271
      %v2288 = vunpack.c.l.b16 %v2272
      %v2289 = vpack.c.b16 %v2286, %v2285
      %v2290 = vpack.c.b16 %v2288, %v2287
      %v2294 = vsel %vm872, %v2260, 0
      %v2297 = vsel %vm872, %v2261, 0
      %v2300 = vsel %vm872, %v2262, 0
      %v2303 = vsel %vm872, %v2263, 0
      %v2306 = vsel %vm872, %v2264, 0
      %v2309 = vsel %vm872, %v2265, 0
      %v2312 = vsel %vm872, %v2266, 0
      %v2315 = vsel %vm872, %v2267, 0
      %2317 = vmatprep.subr.bf16.mxu0 0
      %2318 = vmatpush1.bf16.msra.mxu0 0
      %2319 = vmatprep.subr.bf16.mxu0 0
      %2320 = vmatpush1.bf16.msra.mxu0 0
      %2321 = vmatprep.subr.bf16.mxu0 0
      %2322 = vmatpush1.bf16.msra.mxu0 0
      %2323 = vmatprep.subr.bf16.mxu0 0
      %2324 = vmatpush1.bf16.msra.mxu0 0
      %2325 = vmatprep.subr.bf16.mxu0 0
      %2326 = vmatpush1.bf16.msra.mxu0 0
      %2327 = vmatprep.subr.bf16.mxu0 0
      %2328 = vmatpush1.bf16.msra.mxu0 0
      %2329 = vmatprep.subr.bf16.mxu0 0
      %2330 = vmatpush1.bf16.msra.mxu0 %v2290
      %2331 = vmatprep.subr.bf16.mxu0 0
      %2332 = vmatpush1.bf16.msra.mxu0 %v2289
      %2333 = vmatprep.subr.bf16.mxu0 0
      %2334 = vmatpush2.bf16.msra.mxu0 0
      %2335 = vmatprep.subr.bf16.mxu0 0
      %2336 = vmatpush2.bf16.msra.mxu0 0
      %2337 = vmatprep.subr.bf16.mxu0 0
      %2338 = vmatpush2.bf16.msra.mxu0 0
      %2339 = vmatprep.subr.bf16.mxu0 0
      %2340 = vmatpush2.bf16.msra.mxu0 0
      %2341 = vmatprep.subr.bf16.mxu0 0
      %2342 = vmatpush2.bf16.msra.mxu0 0
      %2343 = vmatprep.subr.bf16.mxu0 0
      %2344 = vmatpush2.bf16.msra.mxu0 0
      %2345 = vmatprep.subr.bf16.mxu0 0
      %2346 = vmatpush2.bf16.msra.mxu0 0
      %2347 = vmatprep.subr.bf16.mxu0 0
      %2348 = vmatpush2.bf16.msra.mxu0 0
      %2349 = vmatprep.mubr.bf16.mxu0 0
      %2350 = vmatmul.mubr.bf16.gmra.mxu0 %v2294
      %v2351 = vpop.f32.mrf.mxu0
      %v2352 = vadd.f32 %v2279, %v2351
      %v2353 = vpop.f32.mrf.mxu0
      %v2354 = vpop.f32.mrf.mxu0
      %v2355 = vadd.f32 %v2279, %v2354
      %v2356 = vpop.f32.mrf.mxu0
      %2357 = vmatprep.mubr.bf16.mxu0 0
      %2358 = vmatmul.mubr.bf16.gmra.mxu0 %v2297
      %v2359 = vpop.f32.mrf.mxu0
      %v2360 = vadd.f32 %v2279, %v2359
      %v2361 = vpop.f32.mrf.mxu0
      %v2362 = vpop.f32.mrf.mxu0
      %v2363 = vadd.f32 %v2279, %v2362
      %v2364 = vpop.f32.mrf.mxu0
      %2365 = vmatprep.mubr.bf16.mxu0 0
      %2366 = vmatmul.mubr.bf16.gmra.mxu0 %v2300
      %v2367 = vpop.f32.mrf.mxu0
      %v2368 = vadd.f32 %v2279, %v2367
      %v2369 = vpop.f32.mrf.mxu0
      %v2370 = vpop.f32.mrf.mxu0
      %v2371 = vadd.f32 %v2279, %v2370
      %v2372 = vpop.f32.mrf.mxu0
      %2373 = vmatprep.mubr.bf16.mxu0 0
      %2374 = vmatmul.mubr.bf16.gmra.mxu0 %v2303
      %v2375 = vpop.f32.mrf.mxu0
      %v2376 = vadd.f32 %v2279, %v2375
      %v2377 = vpop.f32.mrf.mxu0
      %v2378 = vpop.f32.mrf.mxu0
      %v2379 = vadd.f32 %v2279, %v2378
      %v2380 = vpop.f32.mrf.mxu0
      %2381 = vmatprep.mubr.bf16.mxu0 0
      %2382 = vmatmul.mubr.bf16.gmra.mxu0 %v2306
      %v2383 = vpop.f32.mrf.mxu0
      %v2384 = vadd.f32 %v2279, %v2383
      %v2385 = vpop.f32.mrf.mxu0
      %v2386 = vpop.f32.mrf.mxu0
      %v2387 = vadd.f32 %v2279, %v2386
      %v2388 = vpop.f32.mrf.mxu0
      %2389 = vmatprep.mubr.bf16.mxu0 0
      %2390 = vmatmul.mubr.bf16.gmra.mxu0 %v2309
      %v2391 = vpop.f32.mrf.mxu0
      %v2392 = vadd.f32 %v2279, %v2391
      %v2393 = vpop.f32.mrf.mxu0
      %v2394 = vpop.f32.mrf.mxu0
      %v2395 = vadd.f32 %v2279, %v2394
      %v2396 = vpop.f32.mrf.mxu0
      %2397 = vmatprep.mubr.bf16.mxu0 0
      %2398 = vmatmul.mubr.bf16.gmra.mxu0 %v2312
      %v2399 = vpop.f32.mrf.mxu0
      %v2400 = vadd.f32 %v2279, %v2399
      %v2401 = vpop.f32.mrf.mxu0
      %v2402 = vpop.f32.mrf.mxu0
      %v2403 = vadd.f32 %v2279, %v2402
      %v2404 = vpop.f32.mrf.mxu0
      %2405 = vmatprep.mubr.bf16.mxu0 0
      %2406 = vmatmul.mubr.bf16.gmra.mxu0 %v2315
      %v2407 = vpop.f32.mrf.mxu0
      %v2408 = vadd.f32 %v2279, %v2407
      %v2409 = vpop.f32.mrf.mxu0
      %v2410 = vpop.f32.mrf.mxu0
      %v2411 = vadd.f32 %v2279, %v2410
      %v2412 = vpop.f32.mrf.mxu0
      %2413 = vdwg.mxu0
      %v2414 = vmin.f32 %v2352, 20.0
      %v2415 = vmin.f32 %v2355, 20.0
      %v2416 = vmin.f32 %v2360, 20.0
      %v2417 = vmin.f32 %v2363, 20.0
      %v2418 = vmin.f32 %v2368, 20.0
      %v2419 = vmin.f32 %v2371, 20.0
      %v2420 = vmin.f32 %v2376, 20.0
      %v2421 = vmin.f32 %v2379, 20.0
      %v2422 = vmin.f32 %v2384, 20.0
      %v2423 = vmin.f32 %v2387, 20.0
      %v2424 = vmin.f32 %v2392, 20.0
      %v2425 = vmin.f32 %v2395, 20.0
      %v2426 = vmin.f32 %v2400, 20.0
      %v2427 = vmin.f32 %v2403, 20.0
      %v2428 = vmin.f32 %v2408, 20.0
      %v2429 = vmin.f32 %v2411, 20.0
      %v2430 = vmul.f32 %v2414, 1.442695
      %v2431 = vpow.pop %v2430
      %v2432 = vmul.f32 %v2415, 1.442695
      %v2433 = vpow.pop %v2432
      %v2434 = vmul.f32 %v2416, 1.442695
      %v2435 = vpow.pop %v2434
      %v2436 = vmul.f32 %v2417, 1.442695
      %v2437 = vpow.pop %v2436
      %v2438 = vmul.f32 %v2418, 1.442695
      %v2439 = vpow.pop %v2438
      %v2440 = vmul.f32 %v2419, 1.442695
      %v2441 = vpow.pop %v2440
      %v2442 = vmul.f32 %v2420, 1.442695
      %v2443 = vpow.pop %v2442
      %v2444 = vmul.f32 %v2421, 1.442695
      %v2445 = vpow.pop %v2444
      %v2446 = vmul.f32 %v2422, 1.442695
      %v2447 = vpow.pop %v2446
      %v2448 = vmul.f32 %v2423, 1.442695
      %v2449 = vpow.pop %v2448
      %v2450 = vmul.f32 %v2424, 1.442695
      %v2451 = vpow.pop %v2450
      %v2452 = vmul.f32 %v2425, 1.442695
      %v2453 = vpow.pop %v2452
      %v2454 = vmul.f32 %v2426, 1.442695
      %v2455 = vpow.pop %v2454
      %v2456 = vmul.f32 %v2427, 1.442695
      %v2457 = vpow.pop %v2456
      %v2458 = vmul.f32 %v2428, 1.442695
      %v2459 = vpow.pop %v2458
      %v2460 = vmul.f32 %v2429, 1.442695
      %v2461 = vpow.pop %v2460
      %v2462 = vadd.f32 %v2431, 2.0
      %v2463 = vadd.f32 %v2433, 2.0
      %v2464 = vadd.f32 %v2435, 2.0
      %v2465 = vadd.f32 %v2437, 2.0
      %v2466 = vadd.f32 %v2439, 2.0
      %v2467 = vadd.f32 %v2441, 2.0
      %v2468 = vadd.f32 %v2443, 2.0
      %v2469 = vadd.f32 %v2445, 2.0
      %v2470 = vadd.f32 %v2447, 2.0
      %v2471 = vadd.f32 %v2449, 2.0
      %v2472 = vadd.f32 %v2451, 2.0
      %v2473 = vadd.f32 %v2453, 2.0
      %v2474 = vadd.f32 %v2455, 2.0
      %v2475 = vadd.f32 %v2457, 2.0
      %v2476 = vadd.f32 %v2459, 2.0
      %v2477 = vadd.f32 %v2461, 2.0
      %v2478 = vmul.f32 %v2431, %v2462
      %v2479 = vmul.f32 %v2433, %v2463
      %v2480 = vmul.f32 %v2435, %v2464
      %v2481 = vmul.f32 %v2437, %v2465
      %v2482 = vmul.f32 %v2439, %v2466
      %v2483 = vmul.f32 %v2441, %v2467
      %v2484 = vmul.f32 %v2443, %v2468
      %v2485 = vmul.f32 %v2445, %v2469
      %v2486 = vmul.f32 %v2447, %v2470
      %v2487 = vmul.f32 %v2449, %v2471
      %v2488 = vmul.f32 %v2451, %v2472
      %v2489 = vmul.f32 %v2453, %v2473
      %v2490 = vmul.f32 %v2455, %v2474
      %v2491 = vmul.f32 %v2457, %v2475
      %v2492 = vmul.f32 %v2459, %v2476
      %v2493 = vmul.f32 %v2461, %v2477
      %v2494 = vadd.f32 %v2478, 2.0
      %v2495 = vadd.f32 %v2479, 2.0
      %v2496 = vadd.f32 %v2480, 2.0
      %v2497 = vadd.f32 %v2481, 2.0
      %v2498 = vadd.f32 %v2482, 2.0
      %v2499 = vadd.f32 %v2483, 2.0
      %v2500 = vadd.f32 %v2484, 2.0
      %v2501 = vadd.f32 %v2485, 2.0
      %v2502 = vadd.f32 %v2486, 2.0
      %v2503 = vadd.f32 %v2487, 2.0
      %v2504 = vadd.f32 %v2488, 2.0
      %v2505 = vadd.f32 %v2489, 2.0
      %v2506 = vadd.f32 %v2490, 2.0
      %v2507 = vadd.f32 %v2491, 2.0
      %v2508 = vadd.f32 %v2492, 2.0
      %v2509 = vadd.f32 %v2493, 2.0
      %v2510 = vrcp.pop %v2494
      %v2511 = vrcp.pop %v2495
      %v2512 = vrcp.pop %v2496
      %v2513 = vrcp.pop %v2497
      %v2514 = vrcp.pop %v2498
      %v2515 = vrcp.pop %v2499
      %v2516 = vrcp.pop %v2500
      %v2517 = vrcp.pop %v2501
      %v2518 = vrcp.pop %v2502
      %v2519 = vrcp.pop %v2503
      %v2520 = vrcp.pop %v2504
      %v2521 = vrcp.pop %v2505
      %v2522 = vrcp.pop %v2506
      %v2523 = vrcp.pop %v2507
      %v2524 = vrcp.pop %v2508
      %v2525 = vrcp.pop %v2509
      %v2526 = vmul.f32 %v2494, %v2510
      %v2527 = vmul.f32 %v2495, %v2511
      %v2528 = vmul.f32 %v2496, %v2512
      %v2529 = vmul.f32 %v2497, %v2513
      %v2530 = vmul.f32 %v2498, %v2514
      %v2531 = vmul.f32 %v2499, %v2515
      %v2532 = vmul.f32 %v2500, %v2516
      %v2533 = vmul.f32 %v2501, %v2517
      %v2534 = vmul.f32 %v2502, %v2518
      %v2535 = vmul.f32 %v2503, %v2519
      %v2536 = vmul.f32 %v2504, %v2520
      %v2537 = vmul.f32 %v2505, %v2521
      %v2538 = vmul.f32 %v2506, %v2522
      %v2539 = vmul.f32 %v2507, %v2523
      %v2540 = vmul.f32 %v2508, %v2524
      %v2541 = vmul.f32 %v2509, %v2525
      %v2542 = vsub.f32 2.0, %v2526
      %v2543 = vsub.f32 2.0, %v2527
      %v2544 = vsub.f32 2.0, %v2528
      %v2545 = vsub.f32 2.0, %v2529
      %v2546 = vsub.f32 2.0, %v2530
      %v2547 = vsub.f32 2.0, %v2531
      %v2548 = vsub.f32 2.0, %v2532
      %v2549 = vsub.f32 2.0, %v2533
      %v2550 = vsub.f32 2.0, %v2534
      %v2551 = vsub.f32 2.0, %v2535
      %v2552 = vsub.f32 2.0, %v2536
      %v2553 = vsub.f32 2.0, %v2537
      %v2554 = vsub.f32 2.0, %v2538
      %v2555 = vsub.f32 2.0, %v2539
      %v2556 = vsub.f32 2.0, %v2540
      %v2557 = vsub.f32 2.0, %v2541
      %v2558 = vmul.f32 %v2510, %v2542
      %v2559 = vmul.f32 %v2511, %v2543
      %v2560 = vmul.f32 %v2512, %v2544
      %v2561 = vmul.f32 %v2513, %v2545
      %v2562 = vmul.f32 %v2514, %v2546
      %v2563 = vmul.f32 %v2515, %v2547
      %v2564 = vmul.f32 %v2516, %v2548
      %v2565 = vmul.f32 %v2517, %v2549
      %v2566 = vmul.f32 %v2518, %v2550
      %v2567 = vmul.f32 %v2519, %v2551
      %v2568 = vmul.f32 %v2520, %v2552
      %v2569 = vmul.f32 %v2521, %v2553
      %v2570 = vmul.f32 %v2522, %v2554
      %v2571 = vmul.f32 %v2523, %v2555
      %v2572 = vmul.f32 %v2524, %v2556
      %v2573 = vmul.f32 %v2525, %v2557
      %v2574 = vmul.f32 %v2352, %v2478
      %v2575 = vmul.f32 %v2355, %v2479
      %v2576 = vmul.f32 %v2360, %v2480
      %v2577 = vmul.f32 %v2363, %v2481
      %v2578 = vmul.f32 %v2368, %v2482
      %v2579 = vmul.f32 %v2371, %v2483
      %v2580 = vmul.f32 %v2376, %v2484
      %v2581 = vmul.f32 %v2379, %v2485
      %v2582 = vmul.f32 %v2384, %v2486
      %v2583 = vmul.f32 %v2387, %v2487
      %v2584 = vmul.f32 %v2392, %v2488
      %v2585 = vmul.f32 %v2395, %v2489
      %v2586 = vmul.f32 %v2400, %v2490
      %v2587 = vmul.f32 %v2403, %v2491
      %v2588 = vmul.f32 %v2408, %v2492
      %v2589 = vmul.f32 %v2411, %v2493
      %v2590 = vmul.f32 %v2574, %v2558
      %v2591 = vmul.f32 %v2575, %v2559
      %v2592 = vmul.f32 %v2576, %v2560
      %v2593 = vmul.f32 %v2577, %v2561
      %v2594 = vmul.f32 %v2578, %v2562
      %v2595 = vmul.f32 %v2579, %v2563
      %v2596 = vmul.f32 %v2580, %v2564
      %v2597 = vmul.f32 %v2581, %v2565
      %v2598 = vmul.f32 %v2582, %v2566
      %v2599 = vmul.f32 %v2583, %v2567
      %v2600 = vmul.f32 %v2584, %v2568
      %v2601 = vmul.f32 %v2585, %v2569
      %v2602 = vmul.f32 %v2586, %v2570
      %v2603 = vmul.f32 %v2587, %v2571
      %v2604 = vmul.f32 %v2588, %v2572
      %v2605 = vmul.f32 %v2589, %v2573
      %s2606 = scalar_lea.vmem %s8, 1
      %v2607 = vld [vmem:[%s2606] sm:$0x1]
      %v2609 = vlaneseq
      %v2610 = vshrl.u32 %v2609, 7
      %v2611 = vsub.s32 0, %v2610
      %v2612 = vrot.slane %v2607, %v2611
      %v2614 = vmul.f32 %v2590, %v2612
      %v2615 = vmul.f32 %v2591, %v2612
      %v2616 = vmul.f32 %v2592, %v2612
      %v2617 = vmul.f32 %v2593, %v2612
      %v2618 = vmul.f32 %v2594, %v2612
      %v2619 = vmul.f32 %v2595, %v2612
      %v2620 = vmul.f32 %v2596, %v2612
      %v2621 = vmul.f32 %v2597, %v2612
      %v2622 = vmul.f32 %v2598, %v2612
      %v2623 = vmul.f32 %v2599, %v2612
      %v2624 = vmul.f32 %v2600, %v2612
      %v2625 = vmul.f32 %v2601, %v2612
      %v2626 = vmul.f32 %v2602, %v2612
      %v2627 = vmul.f32 %v2603, %v2612
      %v2628 = vmul.f32 %v2604, %v2612
      %v2629 = vmul.f32 %v2605, %v2612
      %v2630 = vsel %vm872, %v2614, 0.0
      %2631 = vadd.xlane.f32.xlu0 %v2630
      %v2632 = vpop.xlane.xlu0 %2631
      %v2633 = vsel %vm872, %v2615, 0.0
      %2634 = vadd.xlane.f32.xlu0 %v2633
      %v2635 = vpop.xlane.xlu0 %2634
      %v2636 = vsel %vm872, %v2616, 0.0
      %2637 = vadd.xlane.f32.xlu0 %v2636
      %v2638 = vpop.xlane.xlu0 %2637
      %v2639 = vsel %vm872, %v2617, 0.0
      %2640 = vadd.xlane.f32.xlu0 %v2639
      %v2641 = vpop.xlane.xlu0 %2640
      %v2642 = vsel %vm872, %v2618, 0.0
      %2643 = vadd.xlane.f32.xlu0 %v2642
      %v2644 = vpop.xlane.xlu0 %2643
      %v2645 = vsel %vm872, %v2619, 0.0
      %2646 = vadd.xlane.f32.xlu0 %v2645
      %v2647 = vpop.xlane.xlu0 %2646
      %v2648 = vsel %vm872, %v2620, 0.0
      %2649 = vadd.xlane.f32.xlu0 %v2648
      %v2650 = vpop.xlane.xlu0 %2649
      %v2651 = vsel %vm872, %v2621, 0.0
      %2652 = vadd.xlane.f32.xlu0 %v2651
      %v2653 = vpop.xlane.xlu0 %2652
      %v2654 = vsel %vm872, %v2622, 0.0
      %2655 = vadd.xlane.f32.xlu0 %v2654
      %v2656 = vpop.xlane.xlu0 %2655
      %v2657 = vsel %vm872, %v2623, 0.0
      %2658 = vadd.xlane.f32.xlu0 %v2657
      %v2659 = vpop.xlane.xlu0 %2658
      %v2660 = vsel %vm872, %v2624, 0.0
      %2661 = vadd.xlane.f32.xlu0 %v2660
      %v2662 = vpop.xlane.xlu0 %2661
      %v2663 = vsel %vm872, %v2625, 0.0
      %2664 = vadd.xlane.f32.xlu0 %v2663
      %v2665 = vpop.xlane.xlu0 %2664
      %v2666 = vsel %vm872, %v2626, 0.0
      %2667 = vadd.xlane.f32.xlu0 %v2666
      %v2668 = vpop.xlane.xlu0 %2667
      %v2669 = vsel %vm872, %v2627, 0.0
      %2670 = vadd.xlane.f32.xlu0 %v2669
      %v2671 = vpop.xlane.xlu0 %2670
      %v2672 = vsel %vm872, %v2628, 0.0
      %2673 = vadd.xlane.f32.xlu0 %v2672
      %v2674 = vpop.xlane.xlu0 %2673
      %v2675 = vsel %vm872, %v2629, 0.0
      %2676 = vadd.xlane.f32.xlu0 %v2675
      %v2677 = vpop.xlane.xlu0 %2676
      %v2694 = vlaneseq
      %v2695 = vand.u32 %v2694, 127
      %v2696 = vlaneseq
      %v2697 = vshrl.u32 %v2696, 7
      %v2698 = vsub.s32 %v2695, %v2697
      %v2699 = vrot.slane %v1555, %v2698
      %v2700 = vadd.s32 %v2695, 4294967288
      %v2701 = vlaneseq
      %v2702 = vshrl.u32 %v2701, 7
      %v2703 = vsub.s32 %v2700, %v2702
      %v2704 = vrot.slane %v1558, %v2703
      %vm2705 = vcmask 130112
      %v2706 = vsel %vm2705, %v2704, %v2699
      %v2707 = vadd.s32 %v2695, 4294967280
      %v2708 = vlaneseq
      %v2709 = vshrl.u32 %v2708, 7
      %v2710 = vsub.s32 %v2707, %v2709
      %v2711 = vrot.slane %v1561, %v2710
      %vm2712 = vcmask 195712
      %v2713 = vsel %vm2712, %v2711, %v2706
      %v2714 = vadd.s32 %v2695, 4294967272
      %v2715 = vlaneseq
      %v2716 = vshrl.u32 %v2715, 7
      %v2717 = vsub.s32 %v2714, %v2716
      %v2718 = vrot.slane %v1564, %v2717
      %vm2719 = vcmask 261312
      %v2720 = vsel %vm2719, %v2718, %v2713
      %v2721 = vadd.s32 %v2695, 4294967264
      %v2722 = vlaneseq
      %v2723 = vshrl.u32 %v2722, 7
      %v2724 = vsub.s32 %v2721, %v2723
      %v2725 = vrot.slane %v1567, %v2724
      %vm2726 = vcmask 326912
      %v2727 = vsel %vm2726, %v2725, %v2720
      %v2728 = vadd.s32 %v2695, 4294967256
      %v2729 = vlaneseq
      %v2730 = vshrl.u32 %v2729, 7
      %v2731 = vsub.s32 %v2728, %v2730
      %v2732 = vrot.slane %v1570, %v2731
      %vm2733 = vcmask 392512
      %v2734 = vsel %vm2733, %v2732, %v2727
      %v2735 = vadd.s32 %v2695, 4294967248
      %v2736 = vlaneseq
      %v2737 = vshrl.u32 %v2736, 7
      %v2738 = vsub.s32 %v2735, %v2737
      %v2739 = vrot.slane %v1573, %v2738
      %vm2740 = vcmask 458112
      %v2741 = vsel %vm2740, %v2739, %v2734
      %v2742 = vadd.s32 %v2695, 4294967240
      %v2743 = vlaneseq
      %v2744 = vshrl.u32 %v2743, 7
      %v2745 = vsub.s32 %v2742, %v2744
      %v2746 = vrot.slane %v1576, %v2745
      %vm2747 = vcmask 523712
      %v2748 = vsel %vm2747, %v2746, %v2741
      %v2749 = vadd.s32 %v2695, 4294967232
      %v2750 = vlaneseq
      %v2751 = vshrl.u32 %v2750, 7
      %v2752 = vsub.s32 %v2749, %v2751
      %v2753 = vrot.slane %v1579, %v2752
      %vm2754 = vcmask 589312
      %v2755 = vsel %vm2754, %v2753, %v2748
      %v2756 = vadd.s32 %v2695, 4294967224
      %v2757 = vlaneseq
      %v2758 = vshrl.u32 %v2757, 7
      %v2759 = vsub.s32 %v2756, %v2758
      %v2760 = vrot.slane %v1582, %v2759
      %vm2761 = vcmask 654912
      %v2762 = vsel %vm2761, %v2760, %v2755
      %v2763 = vadd.s32 %v2695, 4294967216
      %v2764 = vlaneseq
      %v2765 = vshrl.u32 %v2764, 7
      %v2766 = vsub.s32 %v2763, %v2765
      %v2767 = vrot.slane %v1585, %v2766
      %vm2768 = vcmask 720512
      %v2769 = vsel %vm2768, %v2767, %v2762
      %v2770 = vadd.s32 %v2695, 4294967208
      %v2771 = vlaneseq
      %v2772 = vshrl.u32 %v2771, 7
      %v2773 = vsub.s32 %v2770, %v2772
      %v2774 = vrot.slane %v1588, %v2773
      %vm2775 = vcmask 786112
      %v2776 = vsel %vm2775, %v2774, %v2769
      %v2777 = vadd.s32 %v2695, 4294967200
      %v2778 = vlaneseq
      %v2779 = vshrl.u32 %v2778, 7
      %v2780 = vsub.s32 %v2777, %v2779
      %v2781 = vrot.slane %v1591, %v2780
      %vm2782 = vcmask 851712
      %v2783 = vsel %vm2782, %v2781, %v2776
      %v2784 = vadd.s32 %v2695, 4294967192
      %v2785 = vlaneseq
      %v2786 = vshrl.u32 %v2785, 7
      %v2787 = vsub.s32 %v2784, %v2786
      %v2788 = vrot.slane %v1594, %v2787
      %vm2789 = vcmask 917312
      %v2790 = vsel %vm2789, %v2788, %v2783
      %v2791 = vadd.s32 %v2695, 4294967184
      %v2792 = vlaneseq
      %v2793 = vshrl.u32 %v2792, 7
      %v2794 = vsub.s32 %v2791, %v2793
      %v2795 = vrot.slane %v1597, %v2794
      %vm2796 = vcmask 982912
      %v2797 = vsel %vm2796, %v2795, %v2790
      %v2798 = vadd.s32 %v2695, 4294967176
      %v2799 = vlaneseq
      %v2800 = vshrl.u32 %v2799, 7
      %v2801 = vsub.s32 %v2798, %v2800
      %v2802 = vrot.slane %v1600, %v2801
      %vm2803 = vcmask 1048512
      %v2804 = vsel %vm2803, %v2802, %v2797
      %v2822 = vlaneseq
      %v2823 = vshrl.u32 %v2822, 7
      %v2824 = vsub.s32 %v2695, %v2823
      %v2825 = vrot.slane %v2632, %v2824
      %v2826 = vlaneseq
      %v2827 = vshrl.u32 %v2826, 7
      %v2828 = vsub.s32 %v2700, %v2827
      %v2829 = vrot.slane %v2635, %v2828
      %v2830 = vsel %vm2705, %v2829, %v2825
      %v2831 = vlaneseq
      %v2832 = vshrl.u32 %v2831, 7
      %v2833 = vsub.s32 %v2707, %v2832
      %v2834 = vrot.slane %v2638, %v2833
      %v2835 = vsel %vm2712, %v2834, %v2830
      %v2836 = vlaneseq
      %v2837 = vshrl.u32 %v2836, 7
      %v2838 = vsub.s32 %v2714, %v2837
      %v2839 = vrot.slane %v2641, %v2838
      %v2840 = vsel %vm2719, %v2839, %v2835
      %v2841 = vlaneseq
      %v2842 = vshrl.u32 %v2841, 7
      %v2843 = vsub.s32 %v2721, %v2842
      %v2844 = vrot.slane %v2644, %v2843
      %v2845 = vsel %vm2726, %v2844, %v2840
      %v2846 = vlaneseq
      %v2847 = vshrl.u32 %v2846, 7
      %v2848 = vsub.s32 %v2728, %v2847
      %v2849 = vrot.slane %v2647, %v2848
      %v2850 = vsel %vm2733, %v2849, %v2845
      %v2851 = vlaneseq
      %v2852 = vshrl.u32 %v2851, 7
      %v2853 = vsub.s32 %v2735, %v2852
      %v2854 = vrot.slane %v2650, %v2853
      %v2855 = vsel %vm2740, %v2854, %v2850
      %v2856 = vlaneseq
      %v2857 = vshrl.u32 %v2856, 7
      %v2858 = vsub.s32 %v2742, %v2857
      %v2859 = vrot.slane %v2653, %v2858
      %v2860 = vsel %vm2747, %v2859, %v2855
      %v2861 = vlaneseq
      %v2862 = vshrl.u32 %v2861, 7
      %v2863 = vsub.s32 %v2749, %v2862
      %v2864 = vrot.slane %v2656, %v2863
      %v2865 = vsel %vm2754, %v2864, %v2860
      %v2866 = vlaneseq
      %v2867 = vshrl.u32 %v2866, 7
      %v2868 = vsub.s32 %v2756, %v2867
      %v2869 = vrot.slane %v2659, %v2868
      %v2870 = vsel %vm2761, %v2869, %v2865
      %v2871 = vlaneseq
      %v2872 = vshrl.u32 %v2871, 7
      %v2873 = vsub.s32 %v2763, %v2872
      %v2874 = vrot.slane %v2662, %v2873
      %v2875 = vsel %vm2768, %v2874, %v2870
      %v2876 = vlaneseq
      %v2877 = vshrl.u32 %v2876, 7
      %v2878 = vsub.s32 %v2770, %v2877
      %v2879 = vrot.slane %v2665, %v2878
      %v2880 = vsel %vm2775, %v2879, %v2875
      %v2881 = vlaneseq
      %v2882 = vshrl.u32 %v2881, 7
      %v2883 = vsub.s32 %v2777, %v2882
      %v2884 = vrot.slane %v2668, %v2883
      %v2885 = vsel %vm2782, %v2884, %v2880
      %v2886 = vlaneseq
      %v2887 = vshrl.u32 %v2886, 7
      %v2888 = vsub.s32 %v2784, %v2887
      %v2889 = vrot.slane %v2671, %v2888
      %v2890 = vsel %vm2789, %v2889, %v2885
      %v2891 = vlaneseq
      %v2892 = vshrl.u32 %v2891, 7
      %v2893 = vsub.s32 %v2791, %v2892
      %v2894 = vrot.slane %v2674, %v2893
      %v2895 = vsel %vm2796, %v2894, %v2890
      %v2896 = vlaneseq
      %v2897 = vshrl.u32 %v2896, 7
      %v2898 = vsub.s32 %v2798, %v2897
      %v2899 = vrot.slane %v2677, %v2898
      %v2900 = vsel %vm2803, %v2899, %v2895
      %vm2902 = vcmask 1040384
      %v2903 = vsel %vm2902, %v2804, %v2900
      %v2904 = vld [vmem:[%s9] sm:$0x3]
      %2906 = vset.pattern.permute.xlu0 0
      %2907 = vperm.xlu0 %2906, %v2904
      %v2908 = vpop.permute.xlu0 %2907
      %v2910 = vadd.f32 %v2903, %v2908
      %2911 = vst [vmem:[%s381] sm:$0x3] %v2910
      %p2912 = scmp.lt.s32.totalorder %s21, 1
      %s2913 = scalar_select %p2912, %s21, 1
      %s2914 = smul.addr %s2913, 2
      %s2915 = scalar_lea.vmem %s10, %s2914
      // Predicated region
      $region61: #{forward.1} parent=59 // pred_check
        %p2916 = pneg %p259
      $region62: #{forward.1} parent=59 // pred_check_branch
        %2918 = sbr.rel (%p2916) target = $region64
      $region63: #{forward.1} parent=59 // pred_region
        _
      $region64: #{forward.1} parent=59 // pred_fallthru
        _
    $region60: #{forward.1} parent=5 // pred_fallthru
      _
    %p2919 = scmp.le.s32.totalorder 2, %s16
    // Predicated region
    $region65: #{forward.1} parent=5 // pred_check
      %p2920 = pneg %p2919
    $region66: #{forward.1} parent=5 // pred_check_branch
      %2922 = sbr.rel (%p2920) target = $region68
    $region67: #{forward.1} parent=5 // pred_region
      %s2923 = ssub.s32 %s16, 2
      // Predicated region
      $region69: #{forward.1} parent=67 // pred_check
        %p2924 = pneg %p265
      $region70: #{forward.1} parent=67 // pred_check_branch
        %2926 = sbr.rel (%p2924) target = $region72
      $region71: #{forward.1} parent=67 // pred_region
        %p2927 = scmp.lt.s32.totalorder %s22, 1
        %s2928 = scalar_select %p2927, %s22, 1
        %s2929 = smul.addr %s2928, 2
        %s2930 = scalar_lea.vmem %s10, %s2929
      $region72: #{forward.1} parent=67 // pred_fallthru
        _
    $region68: #{forward.1} parent=5 // pred_fallthru
      _
  $region6: #{forward.1} parent=0 // loop_footer
    %s20 = sadd.s32 1, %s16
  $region7: #{forward.1} parent=0 // loop_footer_branch
    %15 = sbr.rel target = $region3
  $region8: #{forward.1} parent=0 // loop_exit
    _

</llo_original>
